<compile_context>
chip_gen: v6e
topology: v6e:2x2x1
jax: 0.10.0
libtpu: 0.0.40
codegen_flags: <defaults>
</compile_context>

<pallas_src>
import functools

import jax
import jax.numpy as jnp
import numpy as np
from jax import lax
from jax.experimental import pallas as pl
from jax.experimental.pallas import tpu as pltpu

EPS = 1e-5


# ------------------------------- helpers ----------------------------------- #

def _vmem_cap_bytes():
    """~75% of physical VMEM (headroom for compiler scratch / pipelining), >=32 MiB."""
    try:
        phys = int(pltpu.get_tpu_info().vmem_capacity_bytes)
    except Exception:
        phys = 64 * 2 ** 20
    if phys <= 0:
        phys = 64 * 2 ** 20
    return max(32 * 2 ** 20, (phys * 3) // 4)


def _cparams(block_bytes, semantics):
    limit = int(min(_vmem_cap_bytes(), max(32 * 2 ** 20, 2 * block_bytes + (4 << 20))))
    # TODO(synk): on v7x, pltpu.CORE_PARALLEL on the outer axis would split grid steps
    # across the two TensorCores; kept as "parallel" here for portability.
    return pltpu.CompilerParams(dimension_semantics=semantics,
                                vmem_limit_bytes=limit)


def _row_tile(M):
    # Fixed large tiles; the grid uses pl.cdiv so M need not divide evenly (the last
    # block is masked).  Keep >=2 grid steps when possible (pipelining / megacore).
    for t in (1024, 512, 256, 128, 64, 32, 16, 8):
        if t <= M and M // t >= 2:
            return t
    return M


def _pick_th(Ho, Wo, P, E, cap_bytes):
    """Output-row tile for stage2: divides Ho, keeps th*Wo a multiple of 8, bounds the
    per-step live bytes, and prefers >=2 row blocks per image."""
    divisors = sorted((d for d in range(1, Ho + 1) if Ho % d == 0), reverse=True)
    per_row = Wo * (9 * P * 6 + 6 * P + 10 * E)      # rough per-output-row live bytes
    budget = max(cap_bytes // 6, 1 << 20)
    th = Ho
    for d in divisors:
        if d * per_row <= budget and ((d * Wo) % 8 == 0 or d * Wo == Ho * Wo):
            th = d
            break
    if th == Ho:
        for d in divisors:
            if d < Ho and (d * Wo) % 8 == 0:
                th = d
                break
    return th


# ----------------------------- stage-1 kernels ------------------------------ #

def _stage1_kernel(x_ref, s1_ref, b1_ref, w1_ref, s2_ref, b2_ref, a2_ref):
    """a2 = relu(bn2(conv1(relu(bn1(x)))))  -- one HBM read of x, one bf16 write of a2."""
    a1 = jnp.maximum(x_ref[...] * s1_ref[...] + b1_ref[...], 0.0)          # f32 VPU math
    y1 = jnp.dot(a1.astype(jnp.bfloat16), w1_ref[...],
                 preferred_element_type=jnp.float32)                       # bf16 MXU
    a2_ref[...] = jnp.maximum(y1 * s2_ref[...] + b2_ref[...], 0.0).astype(a2_ref.dtype)


def _stage1_dual_kernel(x_ref, s1_ref, b1_ref, w1_ref, s2_ref, b2_ref, wsc_ref,
                        a2_ref, sc_ref):
    """Same as _stage1_kernel plus the stride==1 projection shortcut (shares relu(bn1(x)));
    the shortcut is stored bf16 to halve its HBM write and the residual re-read."""
    a1 = jnp.maximum(x_ref[...] * s1_ref[...] + b1_ref[...], 0.0)
    a1b = a1.astype(jnp.bfloat16)
    y1 = jnp.dot(a1b, w1_ref[...], preferred_element_type=jnp.float32)
    a2_ref[...] = jnp.maximum(y1 * s2_ref[...] + b2_ref[...], 0.0).astype(a2_ref.dtype)
    sc_ref[...] = jnp.dot(a1b, wsc_ref[...],
                          preferred_element_type=jnp.float32).astype(sc_ref.dtype)


# ----------------------------- stage-2 kernels ------------------------------ #

def _fill_padded_slab(a2_ref, pad_ref):
    """Zero-halo padded copy of the current image's activation into the VMEM scratch."""
    H, W, P = a2_ref.shape
    pad_ref[...] = jnp.zeros((H + 2, W + 2, P), jnp.float32)
    # TODO(synk): slab kept in f32: sublane-offset / strided tap slices of packed bf16
    # are a lowering risk; only the im2col columns below are bf16 (MXU operands).
    pad_ref[1:H + 1, 1:W + 1, :] = a2_ref[...].astype(jnp.float32)


def _conv3x3_rowblock(pad_ref, w2_ref, rb, *, stride, th, Wo, P):
    """3x3 conv for output rows [rb*th, (rb+1)*th): one (th*Wo, 9P) @ (9P, P) MXU matmul
    over a VMEM-built im2col slab (replaces 9 small K=P matmuls + 8 f32 adds)."""
    nrows = (th - 1) * stride + 3
    r0 = pl.multiple_of(rb * (th * stride), th * stride)
    slab = pad_ref[pl.ds(r0, nrows), :, :]                         # (nrows, W+2, P) f32
    taps = []
    for ky in range(3):
        for kx in range(3):
            t = slab[ky:ky + (th - 1) * stride + 1:stride,
                     kx:kx + (Wo - 1) * stride + 1:stride, :]      # (th, Wo, P)
            taps.append(t.astype(jnp.bfloat16))
    cols = jnp.concatenate(taps, axis=-1).reshape(th * Wo, 9 * P)  # bf16 im2col in VMEM
    return jnp.dot(cols, w2_ref[...], preferred_element_type=jnp.float32)


def _stage2_kernel(a2_ref, s3_ref, b3_ref, w2_ref, w3_ref, res_ref, out_ref, pad_ref,
                   *, stride, th, Wo, P):
    """out = conv3(relu(bn3(conv3x3(a2)))) + residual, for one row block of one image."""
    rb = pl.program_id(1)

    @pl.when(rb == 0)                          # padded slab is built once per image
    def _():
        _fill_padded_slab(a2_ref, pad_ref)

    y2 = _conv3x3_rowblock(pad_ref, w2_ref, rb, stride=stride, th=th, Wo=Wo, P=P)
    a3 = jnp.maximum(y2 * s3_ref[...] + b3_ref[...], 0.0).astype(jnp.bfloat16)
    y3 = jnp.dot(a3, w3_ref[...], preferred_element_type=jnp.float32)
    out_ref[...] = y3 + res_ref[...].astype(jnp.float32)


def _stage2_fused_sc_kernel(a2_ref, x_ref, s1_ref, b1_ref, wsc_ref, s3_ref, b3_ref,
                            w2_ref, w3_ref, out_ref, pad_ref, *, stride, th, Wo, P):
    """Like _stage2_kernel but the strided 1x1 projection shortcut is computed in-kernel
    from x (no extra pallas_call, no JAX-side strided gather)."""
    rb = pl.program_id(1)

    @pl.when(rb == 0)
    def _():
        _fill_padded_slab(a2_ref, pad_ref)

    y2 = _conv3x3_rowblock(pad_ref, w2_ref, rb, stride=stride, th=th, Wo=Wo, P=P)
    a3 = jnp.maximum(y2 * s3_ref[...] + b3_ref[...], 0.0).astype(jnp.bfloat16)
    y3 = jnp.dot(a3, w3_ref[...], preferred_element_type=jnp.float32)

    Cin = x_ref.shape[-1]
    r0 = pl.multiple_of(rb * (th * stride), th * stride)
    xrows = x_ref[pl.ds(r0, (th - 1) * stride + 1), :, :]          # ((th-1)s+1, W, Cin)
    xs = xrows[::stride, ::stride, :]                              # (th, Wo, Cin)
    a1 = jnp.maximum(xs * s1_ref[...] + b1_ref[...], 0.0)
    res = jnp.dot(a1.reshape(th * Wo, Cin).astype(jnp.bfloat16), wsc_ref[...],
                  preferred_element_type=jnp.float32)
    out_ref[...] = y3 + res


# ------------------------------ pallas wrappers ----------------------------- #

def stage1(x_flat, s1, b1, w1, s2, b2, wsc=None):
    """Fused bn1+relu -> conv1 -> bn2+relu (and optionally the stride-1 shortcut conv)."""
    M, Cin = x_flat.shape
    P = w1.shape[1]
    tm = _row_tile(M)
    grid = (pl.cdiv(M, tm),)
    row = lambda i: (i, 0)
    const = lambda i: (0, 0)
    s1_ = s1.reshape(1, Cin)
    b1_ = b1.reshape(1, Cin)
    s2_ = s2.reshape(1, P)
    b2_ = b2.reshape(1, P)

    # TODO(synk): pipeline_mode=pl.Buffered(3) on the x spec would deepen input buffering
    # on v5e/v6e; left at the default depth for portability.
    in_specs = [pl.BlockSpec((tm, Cin), row),
                pl.BlockSpec((1, Cin), const), pl.BlockSpec((1, Cin), const),
                pl.BlockSpec((Cin, P), const),
                pl.BlockSpec((1, P), const), pl.BlockSpec((1, P), const)]
    args = [x_flat, s1_, b1_, w1, s2_, b2_]
    blk = 2 * tm * Cin * 4 + 2 * Cin * 4 + Cin * P * 2 + 2 * P * 4 + 2 * tm * P * 2

    if wsc is None:
        kernel = _stage1_kernel
        out_shape = jax.ShapeDtypeStruct((M, P), jnp.bfloat16)
        out_specs = pl.BlockSpec((tm, P), row)
    else:
        E = wsc.shape[1]
        kernel = _stage1_dual_kernel
        in_specs.append(pl.BlockSpec((Cin, E), const))
        args.append(wsc)
        out_shape = (jax.ShapeDtypeStruct((M, P), jnp.bfloat16),
                     jax.ShapeDtypeStruct((M, E), jnp.bfloat16))
        out_specs = (pl.BlockSpec((tm, P), row), pl.BlockSpec((tm, E), row))
        blk += Cin * E * 2 + 2 * tm * E * 2

    return pl.pallas_call(
        kernel, out_shape=out_shape, grid=grid,
        in_specs=in_specs, out_specs=out_specs,
        compiler_params=_cparams(blk, ("parallel",)),
    )(*args)


def stage2(a2_img, s3, b3, w2_flat, w3, *, stride, Ho, Wo,
           res=None, x_img=None, s1=None, b1=None, wsc=None):
    """Fused 3x3 conv -> bn3+relu -> conv3 -> (+ residual | + fused strided shortcut),
    row-tiled over output rows: grid = (N, Ho // th)."""
    N, H, W, P = a2_img.shape
    E = w3.shape[1]
    th = _pick_th(Ho, Wo, P, E, _vmem_cap_bytes())
    RB = Ho // th
    s3_ = s3.reshape(1, P)
    b3_ = b3.reshape(1, P)

    img = lambda n, rb: (n, 0, 0, 0)      # per-image block, re-used across row blocks
    vec = lambda n, rb: (0, 0)
    rowblk = lambda n, rb: (n, rb, 0)

    in_specs = [pl.BlockSpec((None, H, W, P), img)]
    args = [a2_img]
    blk = (2 * H * W * P * 2 + (H + 2) * (W + 2) * P * 4
           + 9 * P * P * 2 + P * E * 2
           + th * Wo * (9 * P * 6 + 4 * P * 4 + 3 * E * 4))

    if x_img is None:
        kernel = functools.partial(_stage2_kernel, stride=stride, th=th, Wo=Wo, P=P)
        in_specs += [pl.BlockSpec((1, P), vec), pl.BlockSpec((1, P), vec),
                     pl.BlockSpec((9 * P, P), vec), pl.BlockSpec((P, E), vec),
                     pl.BlockSpec((None, th * Wo, E), rowblk)]
        args += [s3_, b3_, w2_flat, w3, res]
        blk += 2 * th * Wo * E * res.dtype.itemsize
    else:
        Cin = x_img.shape[-1]
        kernel = functools.partial(_stage2_fused_sc_kernel,
                                   stride=stride, th=th, Wo=Wo, P=P)
        in_specs += [pl.BlockSpec((None, H, W, Cin), img),
                     pl.BlockSpec((1, Cin), vec), pl.BlockSpec((1, Cin), vec),
                     pl.BlockSpec((Cin, E), vec),
                     pl.BlockSpec((1, P), vec), pl.BlockSpec((1, P), vec),
                     pl.BlockSpec((9 * P, P), vec), pl.BlockSpec((P, E), vec)]
        args += [x_img, s1.reshape(1, Cin), b1.reshape(1, Cin), wsc,
                 s3_, b3_, w2_flat, w3]
        blk += 2 * H * W * Cin * 4 + Cin * E * 2 + th * Wo * Cin * 8

    return pl.pallas_call(
        kernel,
        out_shape=jax.ShapeDtypeStruct((N, Ho * Wo, E), jnp.float32),
        grid=(N, RB),
        in_specs=in_specs,
        out_specs=pl.BlockSpec((None, th * Wo, E), rowblk),
        scratch_shapes=[pltpu.VMEM((H + 2, W + 2, P), jnp.float32)],
        compiler_params=_cparams(blk, ("parallel", "arbitrary")),
    )(*args)


# ----------------------------- module definition ---------------------------- #

def init_params(key, in_planes, planes, stride):
    """Deterministic synthetic parameters matching PreActBottleneck.__init__ shapes."""
    expansion = 4
    keys = jax.random.split(key, 8)

    def conv_w(k, o, i, kh, kw):
        fan_in = i * kh * kw
        return (jax.random.normal(k, (o, i, kh, kw), jnp.float32)
                * (1.0 / np.sqrt(fan_in)))

    def bn(k, c):
        k1, k2, k3, k4 = jax.random.split(k, 4)
        return dict(
            gamma=1.0 + 0.1 * jax.random.normal(k1, (c,), jnp.float32),
            beta=0.1 * jax.random.normal(k2, (c,), jnp.float32),
            mean=0.1 * jax.random.normal(k3, (c,), jnp.float32),
            var=jnp.abs(jax.random.normal(k4, (c,), jnp.float32)) + 0.5,
        )

    params = dict(
        bn1=bn(keys[0], in_planes),
        conv1=conv_w(keys[1], planes, in_planes, 1, 1),
        bn2=bn(keys[2], planes),
        conv2=conv_w(keys[3], planes, planes, 3, 3),
        bn3=bn(keys[4], planes),
        conv3=conv_w(keys[5], expansion * planes, planes, 1, 1),
    )
    if stride != 1 or in_planes != expansion * planes:
        params['shortcut'] = conv_w(keys[6], expansion * planes, in_planes, 1, 1)
    return params


def _fold_bn(bn, eps=EPS):
    # TODO(synk): BatchNorm is implemented in inference mode (folded running stats);
    # training-mode batch statistics are not reproduced.
    scale = bn['gamma'] / jnp.sqrt(bn['var'] + eps)
    bias = bn['beta'] - bn['mean'] * scale
    return scale, bias


def preact_bottleneck_forward_nhwc(x_nhwc, params, stride=1):
    """PreActBottleneck.forward on channels-last data (transpose-free)."""
    N, H, W, Cin = x_nhwc.shape
    planes = params['conv1'].shape[0]
    E = params['conv3'].shape[0]                       # expansion * planes
    x = x_nhwc.astype(jnp.float32)
    x_flat = x.reshape(N * H * W, Cin)

    s1, b1 = _fold_bn(params['bn1'])
    s2, b2 = _fold_bn(params['bn2'])
    s3, b3 = _fold_bn(params['bn3'])

    # bf16 matmul operands (f32 accumulation happens inside the kernels)
    w1 = params['conv1'][:, :, 0, 0].T.astype(jnp.bfloat16)                   # (Cin, P)
    w2 = jnp.transpose(params['conv2'], (2, 3, 1, 0)).reshape(
        9 * planes, planes).astype(jnp.bfloat16)                              # (9P, P)
    w3 = params['conv3'][:, :, 0, 0].T.astype(jnp.bfloat16)                   # (P, E)

    Ho = (H - 1) // stride + 1
    Wo = (W - 1) // stride + 1

    if 'shortcut' in params:
        wsc = params['shortcut'][:, :, 0, 0].T.astype(jnp.bfloat16)           # (Cin, E)
        if stride == 1:
            # projection shortcut fused into stage1 (shares the bn1+relu activation)
            a2, sc = stage1(x_flat, s1, b1, w1, s2, b2, wsc=wsc)
            out = stage2(a2.reshape(N, H, W, planes), s3, b3, w2, w3,
                         stride=stride, Ho=Ho, Wo=Wo,
                         res=sc.reshape(N, Ho * Wo, E))
        else:
            # strided projection shortcut fused into stage2 (strided in-kernel read of x)
            a2 = stage1(x_flat, s1, b1, w1, s2, b2)
            out = stage2(a2.reshape(N, H, W, planes), s3, b3, w2, w3,
                         stride=stride, Ho=Ho, Wo=Wo,
                         x_img=x, s1=s1, b1=b1, wsc=wsc)
    else:
        a2 = stage1(x_flat, s1, b1, w1, s2, b2)
        out = stage2(a2.reshape(N, H, W, planes), s3, b3, w2, w3,
                     stride=stride, Ho=Ho, Wo=Wo,
                     res=x.reshape(N, Ho * Wo, E))     # identity (stride==1, Cin==E)

    return out.reshape(N, Ho, Wo, E)


def preact_bottleneck_forward(x_nchw, params, stride=1):
    # TODO(synk): in a full ResNet these NCHW<->NHWC transposes should be hoisted to the
    # network boundary; kept per-block here only to match the PyTorch module interface.
    x = jnp.transpose(x_nchw, (0, 2, 3, 1))
    out = preact_bottleneck_forward_nhwc(x, params, stride)
    return jnp.transpose(out, (0, 3, 1, 2))


# --------------------------- pure-JAX reference ----------------------------- #

def ref_forward(x_nchw, params, stride=1, eps=EPS):
    def na(x, bn):
        return jax.nn.relu(
            (x - bn['mean'][None, :, None, None])
            / jnp.sqrt(bn['var'][None, :, None, None] + eps)
            * bn['gamma'][None, :, None, None]
            + bn['beta'][None, :, None, None])

    def conv(x, w, s=1, pad=0):
        return lax.conv_general_dilated(
            x, w, (s, s), ((pad, pad), (pad, pad)),
            dimension_numbers=('NCHW', 'OIHW', 'NCHW'))

    a1 = na(x_nchw, params['bn1'])
    shortcut = conv(a1, params['shortcut'], stride) if 'shortcut' in params else x_nchw
    o = conv(a1, params['conv1'])
    o = na(o, params['bn2'])
    o = conv(o, params['conv2'], stride, 1)
    o = na(o, params['bn3'])
    o = conv(o, params['conv3'])
    return o + shortcut


# ---------------------------------- main ------------------------------------ #

if __name__ == "__main__":
    key = jax.random.PRNGKey(0)

    configs = [
        # (in_planes, planes, stride, N, H, W)
        (4, 4, 1, 2, 16, 16),    # stride-1 projection shortcut (fused into stage1)
        (64, 16, 1, 2, 16, 16),  # identity shortcut
        (64, 16, 2, 2, 16, 16),  # strided projection shortcut (fused into stage2)
    ]
    for i, (cin, planes, stride, n, h, w) in enumerate(configs):
        key, kx, kp = jax.random.split(key, 3)
        x = jax.random.normal(kx, (n, cin, h, w), jnp.float32)   # NCHW
        params = init_params(kp, cin, planes, stride)

        fwd = jax.jit(functools.partial(preact_bottleneck_forward, stride=stride))
        out = jax.block_until_ready(fwd(x, params))

        ref = ref_forward(x, params, stride)
        ho, wo = (h - 1) // stride + 1, (w - 1) // stride + 1
        assert out.shape == ref.shape == (n, 4 * planes, ho, wo), (i, out.shape, ref.shape)
        # bf16 matmul operands / bf16 residual (f32 accumulation) vs the f32 reference
        if not np.allclose(np.asarray(out), np.asarray(ref), atol=2e-1, rtol=5e-2):
            err = float(np.max(np.abs(np.asarray(out) - np.asarray(ref))))
            raise AssertionError(f"config {i}: Pallas output mismatch (max abs err {err})")

    print("KERNEL_OK")
</pallas_src>

<mosaic_0001>
module attributes {stable_mosaic.version = 11 : i64} {
  func.func @_stage1_dual_kernel(%arg0: i32, %arg1: memref<256x4xf32, #tpu.memory_space<vmem>>, %arg2: memref<1x4xf32, #tpu.memory_space<vmem>>, %arg3: memref<1x4xf32, #tpu.memory_space<vmem>>, %arg4: memref<4x4xbf16, #tpu.memory_space<vmem>>, %arg5: memref<1x4xf32, #tpu.memory_space<vmem>>, %arg6: memref<1x4xf32, #tpu.memory_space<vmem>>, %arg7: memref<4x16xbf16, #tpu.memory_space<vmem>>, %arg8: memref<256x4xbf16, #tpu.memory_space<vmem>>, %arg9: memref<256x16xbf16, #tpu.memory_space<vmem>>) attributes {dimension_semantics = [#tpu.dimension_semantics<parallel>], iteration_bounds = array<i64: 2>, scalar_prefetch = 0 : i64, scratch_operands = 0 : i64, tpu.core_type = #tpu.core_type<tc>, window_params = [{transform_indices = @transform_0, window_bounds = array<i64: 256, 4>}, {pipeline_mode = #tpu.pipeline_mode<synchronous>, transform_indices = @transform_1, window_bounds = array<i64: 1, 4>}, {pipeline_mode = #tpu.pipeline_mode<synchronous>, transform_indices = @transform_2, window_bounds = array<i64: 1, 4>}, {pipeline_mode = #tpu.pipeline_mode<synchronous>, transform_indices = @transform_3, window_bounds = array<i64: 4, 4>}, {pipeline_mode = #tpu.pipeline_mode<synchronous>, transform_indices = @transform_4, window_bounds = array<i64: 1, 4>}, {pipeline_mode = #tpu.pipeline_mode<synchronous>, transform_indices = @transform_5, window_bounds = array<i64: 1, 4>}, {pipeline_mode = #tpu.pipeline_mode<synchronous>, transform_indices = @transform_6, window_bounds = array<i64: 4, 16>}, {transform_indices = @transform_7, window_bounds = array<i64: 256, 4>}, {transform_indices = @transform_8, window_bounds = array<i64: 256, 16>}]} {
    %c0 = arith.constant 0 : index
    %c0_0 = arith.constant 0 : index
    %0 = vector.load %arg1[%c0, %c0_0] : memref<256x4xf32, #tpu.memory_space<vmem>>, vector<256x4xf32>
    %c0_1 = arith.constant 0 : index
    %c0_2 = arith.constant 0 : index
    %1 = vector.load %arg2[%c0_1, %c0_2] : memref<1x4xf32, #tpu.memory_space<vmem>>, vector<1x4xf32>
    %2 = vector.broadcast %1 : vector<1x4xf32> to vector<256x4xf32>
    %3 = arith.mulf %0, %2 : vector<256x4xf32>
    %c0_3 = arith.constant 0 : index
    %c0_4 = arith.constant 0 : index
    %4 = vector.load %arg3[%c0_3, %c0_4] : memref<1x4xf32, #tpu.memory_space<vmem>>, vector<1x4xf32>
    %5 = vector.broadcast %4 : vector<1x4xf32> to vector<256x4xf32>
    %6 = arith.addf %3, %5 : vector<256x4xf32>
    %cst = arith.constant 0.000000e+00 : f32
    %7 = vector.broadcast %cst : f32 to vector<256x4xf32>
    %8 = arith.maximumf %6, %7 : vector<256x4xf32>
    %9 = arith.truncf %8 : vector<256x4xf32> to vector<256x4xbf16>
    %c0_5 = arith.constant 0 : index
    %c0_6 = arith.constant 0 : index
    %10 = vector.load %arg4[%c0_5, %c0_6] : memref<4x4xbf16, #tpu.memory_space<vmem>>, vector<4x4xbf16>
    %cst_7 = arith.constant dense<0.000000e+00> : vector<256x4xf32>
    %11 = tpu.matmul %9, %10, %cst_7 {dimension_numbers = #tpu.dot_dimension_numbers<[1], [0], [0], [1], [0, 0, 1, 1], [], []>} : vector<256x4xbf16>, vector<4x4xbf16>, vector<256x4xf32> -> vector<256x4xf32>
    %c0_8 = arith.constant 0 : index
    %c0_9 = arith.constant 0 : index
    %12 = vector.load %arg5[%c0_8, %c0_9] : memref<1x4xf32, #tpu.memory_space<vmem>>, vector<1x4xf32>
    %13 = vector.broadcast %12 : vector<1x4xf32> to vector<256x4xf32>
    %14 = arith.mulf %11, %13 : vector<256x4xf32>
    %c0_10 = arith.constant 0 : index
    %c0_11 = arith.constant 0 : index
    %15 = vector.load %arg6[%c0_10, %c0_11] : memref<1x4xf32, #tpu.memory_space<vmem>>, vector<1x4xf32>
    %16 = vector.broadcast %15 : vector<1x4xf32> to vector<256x4xf32>
    %17 = arith.addf %14, %16 : vector<256x4xf32>
    %cst_12 = arith.constant 0.000000e+00 : f32
    %18 = vector.broadcast %cst_12 : f32 to vector<256x4xf32>
    %19 = arith.maximumf %17, %18 : vector<256x4xf32>
    %20 = arith.truncf %19 : vector<256x4xf32> to vector<256x4xbf16>
    %c0_13 = arith.constant 0 : index
    %c0_14 = arith.constant 0 : index
    %21 = vector.load %arg8[%c0_13, %c0_14] : memref<256x4xbf16, #tpu.memory_space<vmem>>, vector<256x4xbf16>
    tpu.vector_store %arg8[%c0_13, %c0_14], %20 {strides = array<i32>} : memref<256x4xbf16, #tpu.memory_space<vmem>>, vector<256x4xbf16>,
    %c0_15 = arith.constant 0 : index
    %c0_16 = arith.constant 0 : index
    %22 = vector.load %arg7[%c0_15, %c0_16] : memref<4x16xbf16, #tpu.memory_space<vmem>>, vector<4x16xbf16>
    %cst_17 = arith.constant dense<0.000000e+00> : vector<256x16xf32>
    %23 = tpu.matmul %9, %22, %cst_17 {dimension_numbers = #tpu.dot_dimension_numbers<[1], [0], [0], [1], [0, 0, 1, 1], [], []>} : vector<256x4xbf16>, vector<4x16xbf16>, vector<256x16xf32> -> vector<256x16xf32>
    %24 = arith.truncf %23 : vector<256x16xf32> to vector<256x16xbf16>
    %c0_18 = arith.constant 0 : index
    %c0_19 = arith.constant 0 : index
    %25 = vector.load %arg9[%c0_18, %c0_19] : memref<256x16xbf16, #tpu.memory_space<vmem>>, vector<256x16xbf16>
    tpu.vector_store %arg9[%c0_18, %c0_19], %24 {strides = array<i32>} : memref<256x16xbf16, #tpu.memory_space<vmem>>, vector<256x16xbf16>,
    return
  }
  func.func @transform_0(%arg0: i32) -> (i32, i32) {
    %c0_i32 = arith.constant 0 : i32
    %c0_i32_0 = arith.constant 0 : i32
    return %arg0, %c0_i32 : i32, i32
  }
  func.func @transform_1(%arg0: i32) -> (i32, i32) {
    %c0_i32 = arith.constant 0 : i32
    %c0_i32_0 = arith.constant 0 : i32
    %c0_i32_1 = arith.constant 0 : i32
    return %c0_i32, %c0_i32_0 : i32, i32
  }
  func.func @transform_2(%arg0: i32) -> (i32, i32) {
    %c0_i32 = arith.constant 0 : i32
    %c0_i32_0 = arith.constant 0 : i32
    %c0_i32_1 = arith.constant 0 : i32
    return %c0_i32, %c0_i32_0 : i32, i32
  }
  func.func @transform_3(%arg0: i32) -> (i32, i32) {
    %c0_i32 = arith.constant 0 : i32
    %c0_i32_0 = arith.constant 0 : i32
    %c0_i32_1 = arith.constant 0 : i32
    return %c0_i32, %c0_i32_0 : i32, i32
  }
  func.func @transform_4(%arg0: i32) -> (i32, i32) {
    %c0_i32 = arith.constant 0 : i32
    %c0_i32_0 = arith.constant 0 : i32
    %c0_i32_1 = arith.constant 0 : i32
    return %c0_i32, %c0_i32_0 : i32, i32
  }
  func.func @transform_5(%arg0: i32) -> (i32, i32) {
    %c0_i32 = arith.constant 0 : i32
    %c0_i32_0 = arith.constant 0 : i32
    %c0_i32_1 = arith.constant 0 : i32
    return %c0_i32, %c0_i32_0 : i32, i32
  }
  func.func @transform_6(%arg0: i32) -> (i32, i32) {
    %c0_i32 = arith.constant 0 : i32
    %c0_i32_0 = arith.constant 0 : i32
    %c0_i32_1 = arith.constant 0 : i32
    return %c0_i32, %c0_i32_0 : i32, i32
  }
  func.func @transform_7(%arg0: i32) -> (i32, i32) {
    %c0_i32 = arith.constant 0 : i32
    %c0_i32_0 = arith.constant 0 : i32
    return %arg0, %c0_i32 : i32, i32
  }
  func.func @transform_8(%arg0: i32) -> (i32, i32) {
    %c0_i32 = arith.constant 0 : i32
    %c0_i32_0 = arith.constant 0 : i32
    return %arg0, %c0_i32 : i32, i32
  }
}

module attributes {stable_mosaic.version = 11 : i64} {
  func.func @_stage2_kernel(%arg0: i32, %arg1: i32, %arg2: memref<1x16x16x4xbf16, #tpu.memory_space<vmem>>, %arg3: memref<1x4xf32, #tpu.memory_space<vmem>>, %arg4: memref<1x4xf32, #tpu.memory_space<vmem>>, %arg5: memref<36x4xbf16, #tpu.memory_space<vmem>>, %arg6: memref<4x16xbf16, #tpu.memory_space<vmem>>, %arg7: memref<1x128x16xbf16, #tpu.memory_space<vmem>>, %arg8: memref<1x128x16xf32, #tpu.memory_space<vmem>>, %arg9: memref<18x18x4xf32, #tpu.memory_space<vmem>>) attributes {dimension_semantics = [#tpu.dimension_semantics<parallel>, #tpu.dimension_semantics<arbitrary>], iteration_bounds = array<i64: 2, 2>, scalar_prefetch = 0 : i64, scratch_operands = 1 : i64, tpu.core_type = #tpu.core_type<tc>, window_params = [{transform_indices = @transform_0, window_bounds = array<i64: 1, 16, 16, 4>}, {pipeline_mode = #tpu.pipeline_mode<synchronous>, transform_indices = @transform_1, window_bounds = array<i64: 1, 4>}, {pipeline_mode = #tpu.pipeline_mode<synchronous>, transform_indices = @transform_2, window_bounds = array<i64: 1, 4>}, {pipeline_mode = #tpu.pipeline_mode<synchronous>, transform_indices = @transform_3, window_bounds = array<i64: 36, 4>}, {pipeline_mode = #tpu.pipeline_mode<synchronous>, transform_indices = @transform_4, window_bounds = array<i64: 4, 16>}, {transform_indices = @transform_5, window_bounds = array<i64: 1, 128, 16>}, {transform_indices = @transform_6, window_bounds = array<i64: 1, 128, 16>}]} {
    %c0_i32 = arith.constant 0 : i32
    %0 = arith.cmpi eq, %arg1, %c0_i32 : i32
    %1 = arith.extui %0 : i1 to i32
    %c0_i32_0 = arith.constant 0 : i32
    %2 = arith.cmpi ne, %1, %c0_i32_0 : i32
    scf.if %2 {
      %cst_18 = arith.constant 0.000000e+00 : f32
      %47 = vector.broadcast %cst_18 : f32 to vector<18x18x4xf32>
      %c0_19 = arith.constant 0 : index
      %c0_20 = arith.constant 0 : index
      %c0_21 = arith.constant 0 : index
      %48 = vector.load %arg9[%c0_19, %c0_20, %c0_21] : memref<18x18x4xf32, #tpu.memory_space<vmem>>, vector<18x18x4xf32>
      tpu.vector_store %arg9[%c0_19, %c0_20, %c0_21], %47 {strides = array<i32>} : memref<18x18x4xf32, #tpu.memory_space<vmem>>, vector<18x18x4xf32>,
      %c0_22 = arith.constant 0 : index
      %c0_23 = arith.constant 0 : index
      %c0_24 = arith.constant 0 : index
      %c0_25 = arith.constant 0 : index
      %49 = vector.load %arg2[%c0_22, %c0_23, %c0_24, %c0_25] : memref<1x16x16x4xbf16, #tpu.memory_space<vmem>>, vector<1x16x16x4xbf16>
      %50 = vector.shape_cast %49 : vector<1x16x16x4xbf16> to vector<16x16x4xbf16>
      %51 = arith.extf %50 : vector<16x16x4xbf16> to vector<16x16x4xf32>
      %c1 = arith.constant 1 : index
      %c1_26 = arith.constant 1 : index
      %c0_27 = arith.constant 0 : index
      %52 = vector.load %arg9[%c1, %c1_26, %c0_27] : memref<18x18x4xf32, #tpu.memory_space<vmem>>, vector<16x16x4xf32>
      tpu.vector_store %arg9[%c1, %c1_26, %c0_27], %51 {strides = array<i32>} : memref<18x18x4xf32, #tpu.memory_space<vmem>>, vector<16x16x4xf32>,
    } else {
    }
    %c8_i32 = arith.constant 8 : i32
    %3 = arith.muli %arg1, %c8_i32 : i32
    %4 = tpu.assume_multiple %3, 8 : i32
    %5 = arith.index_cast %4 : i32 to index
    %c0 = arith.constant 0 : index
    %c0_1 = arith.constant 0 : index
    %6 = vector.load %arg9[%5, %c0, %c0_1] : memref<18x18x4xf32, #tpu.memory_space<vmem>>, vector<10x18x4xf32>
    %7 = vector.extract_strided_slice %6 {offsets = [0, 0, 0], sizes = [8, 16, 4], strides = [1, 1, 1]} : vector<10x18x4xf32> to vector<8x16x4xf32>
    %8 = arith.truncf %7 : vector<8x16x4xf32> to vector<8x16x4xbf16>
    %9 = vector.extract_strided_slice %6 {offsets = [0, 1, 0], sizes = [8, 16, 4], strides = [1, 1, 1]} : vector<10x18x4xf32> to vector<8x16x4xf32>
    %10 = arith.truncf %9 : vector<8x16x4xf32> to vector<8x16x4xbf16>
    %11 = vector.extract_strided_slice %6 {offsets = [0, 2, 0], sizes = [8, 16, 4], strides = [1, 1, 1]} : vector<10x18x4xf32> to vector<8x16x4xf32>
    %12 = arith.truncf %11 : vector<8x16x4xf32> to vector<8x16x4xbf16>
    %13 = vector.extract_strided_slice %6 {offsets = [1, 0, 0], sizes = [8, 16, 4], strides = [1, 1, 1]} : vector<10x18x4xf32> to vector<8x16x4xf32>
    %14 = arith.truncf %13 : vector<8x16x4xf32> to vector<8x16x4xbf16>
    %15 = vector.extract_strided_slice %6 {offsets = [1, 1, 0], sizes = [8, 16, 4], strides = [1, 1, 1]} : vector<10x18x4xf32> to vector<8x16x4xf32>
    %16 = arith.truncf %15 : vector<8x16x4xf32> to vector<8x16x4xbf16>
    %17 = vector.extract_strided_slice %6 {offsets = [1, 2, 0], sizes = [8, 16, 4], strides = [1, 1, 1]} : vector<10x18x4xf32> to vector<8x16x4xf32>
    %18 = arith.truncf %17 : vector<8x16x4xf32> to vector<8x16x4xbf16>
    %19 = vector.extract_strided_slice %6 {offsets = [2, 0, 0], sizes = [8, 16, 4], strides = [1, 1, 1]} : vector<10x18x4xf32> to vector<8x16x4xf32>
    %20 = arith.truncf %19 : vector<8x16x4xf32> to vector<8x16x4xbf16>
    %21 = vector.extract_strided_slice %6 {offsets = [2, 1, 0], sizes = [8, 16, 4], strides = [1, 1, 1]} : vector<10x18x4xf32> to vector<8x16x4xf32>
    %22 = arith.truncf %21 : vector<8x16x4xf32> to vector<8x16x4xbf16>
    %23 = vector.extract_strided_slice %6 {offsets = [2, 2, 0], sizes = [8, 16, 4], strides = [1, 1, 1]} : vector<10x18x4xf32> to vector<8x16x4xf32>
    %24 = arith.truncf %23 : vector<8x16x4xf32> to vector<8x16x4xbf16>
    %25 = tpu.concatenate %8, %10, %12, %14, %16, %18, %20, %22, %24 in 2 : vector<8x16x4xbf16>, vector<8x16x4xbf16>, vector<8x16x4xbf16>, vector<8x16x4xbf16>, vector<8x16x4xbf16>, vector<8x16x4xbf16>, vector<8x16x4xbf16>, vector<8x16x4xbf16>, vector<8x16x4xbf16> -> vector<8x16x36xbf16>
    %26 = vector.shape_cast %25 : vector<8x16x36xbf16> to vector<128x36xbf16>
    %c0_2 = arith.constant 0 : index
    %c0_3 = arith.constant 0 : index
    %27 = vector.load %arg5[%c0_2, %c0_3] : memref<36x4xbf16, #tpu.memory_space<vmem>>, vector<36x4xbf16>
    %cst = arith.constant dense<0.000000e+00> : vector<128x4xf32>
    %28 = tpu.matmul %26, %27, %cst {dimension_numbers = #tpu.dot_dimension_numbers<[1], [0], [0], [1], [0, 0, 1, 1], [], []>} : vector<128x36xbf16>, vector<36x4xbf16>, vector<128x4xf32> -> vector<128x4xf32>
    %c0_4 = arith.constant 0 : index
    %c0_5 = arith.constant 0 : index
    %29 = vector.load %arg3[%c0_4, %c0_5] : memref<1x4xf32, #tpu.memory_space<vmem>>, vector<1x4xf32>
    %30 = vector.broadcast %29 : vector<1x4xf32> to vector<128x4xf32>
    %31 = arith.mulf %28, %30 : vector<128x4xf32>
    %c0_6 = arith.constant 0 : index
    %c0_7 = arith.constant 0 : index
    %32 = vector.load %arg4[%c0_6, %c0_7] : memref<1x4xf32, #tpu.memory_space<vmem>>, vector<1x4xf32>
    %33 = vector.broadcast %32 : vector<1x4xf32> to vector<128x4xf32>
    %34 = arith.addf %31, %33 : vector<128x4xf32>
    %cst_8 = arith.constant 0.000000e+00 : f32
    %35 = vector.broadcast %cst_8 : f32 to vector<128x4xf32>
    %36 = arith.maximumf %34, %35 : vector<128x4xf32>
    %37 = arith.truncf %36 : vector<128x4xf32> to vector<128x4xbf16>
    %c0_9 = arith.constant 0 : index
    %c0_10 = arith.constant 0 : index
    %38 = vector.load %arg6[%c0_9, %c0_10] : memref<4x16xbf16, #tpu.memory_space<vmem>>, vector<4x16xbf16>
    %cst_11 = arith.constant dense<0.000000e+00> : vector<128x16xf32>
    %39 = tpu.matmul %37, %38, %cst_11 {dimension_numbers = #tpu.dot_dimension_numbers<[1], [0], [0], [1], [0, 0, 1, 1], [], []>} : vector<128x4xbf16>, vector<4x16xbf16>, vector<128x16xf32> -> vector<128x16xf32>
    %c0_12 = arith.constant 0 : index
    %c0_13 = arith.constant 0 : index
    %c0_14 = arith.constant 0 : index
    %40 = vector.load %arg7[%c0_12, %c0_13, %c0_14] : memref<1x128x16xbf16, #tpu.memory_space<vmem>>, vector<1x128x16xbf16>
    %41 = vector.shape_cast %40 : vector<1x128x16xbf16> to vector<128x16xbf16>
    %42 = arith.extf %41 : vector<128x16xbf16> to vector<128x16xf32>
    %43 = arith.addf %39, %42 : vector<128x16xf32>
    %c0_15 = arith.constant 0 : index
    %c0_16 = arith.constant 0 : index
    %c0_17 = arith.constant 0 : index
    %44 = vector.load %arg8[%c0_15, %c0_16, %c0_17] : memref<1x128x16xf32, #tpu.memory_space<vmem>>, vector<1x128x16xf32>
    %45 = vector.shape_cast %44 : vector<1x128x16xf32> to vector<128x16xf32>
    %46 = vector.shape_cast %43 : vector<128x16xf32> to vector<1x128x16xf32>
    tpu.vector_store %arg8[%c0_15, %c0_16, %c0_17], %46 {strides = array<i32>} : memref<1x128x16xf32, #tpu.memory_space<vmem>>, vector<1x128x16xf32>,
    return
  }
  func.func @transform_0(%arg0: i32, %arg1: i32) -> (i32, i32, i32, i32) {
    %c0_i32 = arith.constant 0 : i32
    %c0_i32_0 = arith.constant 0 : i32
    %c0_i32_1 = arith.constant 0 : i32
    %c0_i32_2 = arith.constant 0 : i32
    return %arg0, %c0_i32, %c0_i32_0, %c0_i32_1 : i32, i32, i32, i32
  }
  func.func @transform_1(%arg0: i32, %arg1: i32) -> (i32, i32) {
    %c0_i32 = arith.constant 0 : i32
    %c0_i32_0 = arith.constant 0 : i32
    %c0_i32_1 = arith.constant 0 : i32
    return %c0_i32, %c0_i32_0 : i32, i32
  }
  func.func @transform_2(%arg0: i32, %arg1: i32) -> (i32, i32) {
    %c0_i32 = arith.constant 0 : i32
    %c0_i32_0 = arith.constant 0 : i32
    %c0_i32_1 = arith.constant 0 : i32
    return %c0_i32, %c0_i32_0 : i32, i32
  }
  func.func @transform_3(%arg0: i32, %arg1: i32) -> (i32, i32) {
    %c0_i32 = arith.constant 0 : i32
    %c0_i32_0 = arith.constant 0 : i32
    %c0_i32_1 = arith.constant 0 : i32
    return %c0_i32, %c0_i32_0 : i32, i32
  }
  func.func @transform_4(%arg0: i32, %arg1: i32) -> (i32, i32) {
    %c0_i32 = arith.constant 0 : i32
    %c0_i32_0 = arith.constant 0 : i32
    %c0_i32_1 = arith.constant 0 : i32
    return %c0_i32, %c0_i32_0 : i32, i32
  }
  func.func @transform_5(%arg0: i32, %arg1: i32) -> (i32, i32, i32) {
    %c0_i32 = arith.constant 0 : i32
    %c0_i32_0 = arith.constant 0 : i32
    return %arg0, %arg1, %c0_i32 : i32, i32, i32
  }
  func.func @transform_6(%arg0: i32, %arg1: i32) -> (i32, i32, i32) {
    %c0_i32 = arith.constant 0 : i32
    %c0_i32_0 = arith.constant 0 : i32
    return %arg0, %arg1, %c0_i32 : i32, i32, i32
  }
}

</mosaic_0001>

<llo_original>
// kernel: preact_bottleneck_forward.2
$region0: #{preact_bottleneck_forward.2}
  #allocation0 [shape = 'u32[]', space=smem, size = 0x4, offset = 0x4, fixed_abs, tag = 'smem constant byte address 0x4 - core index']
  #allocation1 [shape = 'u32[144,128]{1,0:T(1,128)}', space=vmem, size = 0x12000, scoped, tag = 'internal scratch']
  %s0 = inlined_call_operand.vmem [shape: f32[512,4], index: 0, kind: input, shape index: {}]
  %s1 = inlined_call_operand.vmem [shape: f32[1,4], index: 1, kind: input, shape index: {}]
  %s2 = inlined_call_operand.vmem [shape: f32[1,4], index: 2, kind: input, shape index: {}]
  %s3 = inlined_call_operand.vmem [shape: bf16[4,4], index: 3, kind: input, shape index: {}]
  %s4 = inlined_call_operand.vmem [shape: f32[1,4], index: 4, kind: input, shape index: {}]
  %s5 = inlined_call_operand.vmem [shape: f32[1,4], index: 5, kind: input, shape index: {}]
  %s6 = inlined_call_operand.vmem [shape: bf16[4,16], index: 6, kind: input, shape index: {}]
  %s7 = inlined_call_operand.vmem [shape: bf16[512,4], index: 7, kind: output, shape index: {0}]
  %s8 = inlined_call_operand.vmem [shape: bf16[512,16], index: 8, kind: output, shape index: {1}]
  %9 = xla_tuple %s7, %s8
  %s10 = sld [smem:[#allocation0]]
  $region69: #{preact_bottleneck_forward.2} parent=0
    _
  %s12 = ssub.s32 1, %s10
  %s13 = scalar_select 0, %s12, %s10
  loop: start=0, step=1, limit=4
  $region2: #{preact_bottleneck_forward.2} parent=0 // loop_pre_header
    _
  $region3: #{preact_bottleneck_forward.2} parent=0 // loop_header
    %s15 = sphi 0, %s19
    %p16 = scmp.ge.s32.totalorder %s15, 4
    %s25 = sphi 0, %s27
    %s28 = sphi 0, %s25
    %s29 = sphi 0, %s28
    %s45 = sphi 0, %s29
    %s49 = sphi 0, %s49
    %s51 = sphi 0, %s49
    %s52 = sphi 0, %s51
    %s66 = sphi 0, %s52
    %s70 = sphi 0, %s70
    %s72 = sphi 0, %s70
    %s73 = sphi 0, %s72
    %s87 = sphi 0, %s73
    %s91 = sphi 0, %s91
    %s93 = sphi 0, %s91
    %s94 = sphi 0, %s93
    %s108 = sphi 0, %s94
    %s112 = sphi 0, %s112
    %s114 = sphi 0, %s112
    %s115 = sphi 0, %s114
    %s129 = sphi 0, %s115
    %s133 = sphi 0, %s133
    %s135 = sphi 0, %s133
    %s136 = sphi 0, %s135
    %s150 = sphi 0, %s136
    %s154 = sphi 0, %s154
    %s156 = sphi 0, %s154
    %s157 = sphi 0, %s156
    %s171 = sphi 0, %s157
    %s177 = sphi 0, %s179
    %s180 = sphi 0, %s177
    %s181 = sphi 0, %s180
    %s197 = sphi 0, %s181
    %s203 = sphi 0, %s205
    %s206 = sphi 0, %s203
    %s207 = sphi 0, %s206
    %s223 = sphi 0, %s207
  $region4: #{preact_bottleneck_forward.2} parent=0 // loop_header_branch
    %18 = sbr.rel (%p16) target = $region8
  $region5: #{preact_bottleneck_forward.2} parent=0 // loop_body
    %s20 = ssub.s32 %s15, 1
    %s21 = ssub.s32 %s15, 2
    %s22 = sadd.s32 %s15, 1
    %s23 = ssub.s32 %s15, %s22
    %p24 = scmp.eq.s32.totalorder %s23, 0
    %s26 = sadd.s32 %s25, 1
    %s27 = scalar_select %p24, %s25, %s26
    %p30 = pneg %p24
    %p31 = scmp.eq.s32.totalorder %s15, 1
    %p32 = por %p30, %p31
    %p33 = scmp.ne.s32.totalorder %s25, %s28
    %p34 = scmp.eq.s32.totalorder %s15, 0
    %p35 = por %p33, %p34
    %p36 = scmp.ne.s32.totalorder %s25, %s28
    %p37 = scmp.eq.s32.totalorder %s20, 1
    %p38 = por %p36, %p37
    %p39 = scmp.ne.s32.totalorder %s28, %s29
    %p40 = scmp.eq.s32.totalorder %s20, 0
    %p41 = por %p39, %p40
    %p42 = scmp.ne.s32.totalorder %s28, %s29
    %p43 = scmp.eq.s32.totalorder %s21, 1
    %p44 = por %p42, %p43
    %p46 = scmp.ne.s32.totalorder %s29, %s45
    %p47 = scmp.eq.s32.totalorder %s21, 0
    %p48 = por %p46, %p47
    %s50 = sadd.s32 %s49, 1
    %p53 = scmp.eq.s32.totalorder %s15, 1
    %p54 = scmp.ne.s32.totalorder %s49, %s51
    %p55 = scmp.eq.s32.totalorder %s15, 0
    %p56 = por %p54, %p55
    %p57 = scmp.ne.s32.totalorder %s49, %s51
    %p58 = scmp.eq.s32.totalorder %s20, 1
    %p59 = por %p57, %p58
    %p60 = scmp.ne.s32.totalorder %s51, %s52
    %p61 = scmp.eq.s32.totalorder %s20, 0
    %p62 = por %p60, %p61
    %p63 = scmp.ne.s32.totalorder %s51, %s52
    %p64 = scmp.eq.s32.totalorder %s21, 1
    %p65 = por %p63, %p64
    %p67 = scmp.ne.s32.totalorder %s52, %s66
    %p68 = scmp.eq.s32.totalorder %s21, 0
    %p69 = por %p67, %p68
    %s71 = sadd.s32 %s70, 1
    %p74 = scmp.eq.s32.totalorder %s15, 1
    %p75 = scmp.ne.s32.totalorder %s70, %s72
    %p76 = scmp.eq.s32.totalorder %s15, 0
    %p77 = por %p75, %p76
    %p78 = scmp.ne.s32.totalorder %s70, %s72
    %p79 = scmp.eq.s32.totalorder %s20, 1
    %p80 = por %p78, %p79
    %p81 = scmp.ne.s32.totalorder %s72, %s73
    %p82 = scmp.eq.s32.totalorder %s20, 0
    %p83 = por %p81, %p82
    %p84 = scmp.ne.s32.totalorder %s72, %s73
    %p85 = scmp.eq.s32.totalorder %s21, 1
    %p86 = por %p84, %p85
    %p88 = scmp.ne.s32.totalorder %s73, %s87
    %p89 = scmp.eq.s32.totalorder %s21, 0
    %p90 = por %p88, %p89
    %s92 = sadd.s32 %s91, 1
    %p95 = scmp.eq.s32.totalorder %s15, 1
    %p96 = scmp.ne.s32.totalorder %s91, %s93
    %p97 = scmp.eq.s32.totalorder %s15, 0
    %p98 = por %p96, %p97
    %p99 = scmp.ne.s32.totalorder %s91, %s93
    %p100 = scmp.eq.s32.totalorder %s20, 1
    %p101 = por %p99, %p100
    %p102 = scmp.ne.s32.totalorder %s93, %s94
    %p103 = scmp.eq.s32.totalorder %s20, 0
    %p104 = por %p102, %p103
    %p105 = scmp.ne.s32.totalorder %s93, %s94
    %p106 = scmp.eq.s32.totalorder %s21, 1
    %p107 = por %p105, %p106
    %p109 = scmp.ne.s32.totalorder %s94, %s108
    %p110 = scmp.eq.s32.totalorder %s21, 0
    %p111 = por %p109, %p110
    %s113 = sadd.s32 %s112, 1
    %p116 = scmp.eq.s32.totalorder %s15, 1
    %p117 = scmp.ne.s32.totalorder %s112, %s114
    %p118 = scmp.eq.s32.totalorder %s15, 0
    %p119 = por %p117, %p118
    %p120 = scmp.ne.s32.totalorder %s112, %s114
    %p121 = scmp.eq.s32.totalorder %s20, 1
    %p122 = por %p120, %p121
    %p123 = scmp.ne.s32.totalorder %s114, %s115
    %p124 = scmp.eq.s32.totalorder %s20, 0
    %p125 = por %p123, %p124
    %p126 = scmp.ne.s32.totalorder %s114, %s115
    %p127 = scmp.eq.s32.totalorder %s21, 1
    %p128 = por %p126, %p127
    %p130 = scmp.ne.s32.totalorder %s115, %s129
    %p131 = scmp.eq.s32.totalorder %s21, 0
    %p132 = por %p130, %p131
    %s134 = sadd.s32 %s133, 1
    %p137 = scmp.eq.s32.totalorder %s15, 1
    %p138 = scmp.ne.s32.totalorder %s133, %s135
    %p139 = scmp.eq.s32.totalorder %s15, 0
    %p140 = por %p138, %p139
    %p141 = scmp.ne.s32.totalorder %s133, %s135
    %p142 = scmp.eq.s32.totalorder %s20, 1
    %p143 = por %p141, %p142
    %p144 = scmp.ne.s32.totalorder %s135, %s136
    %p145 = scmp.eq.s32.totalorder %s20, 0
    %p146 = por %p144, %p145
    %p147 = scmp.ne.s32.totalorder %s135, %s136
    %p148 = scmp.eq.s32.totalorder %s21, 1
    %p149 = por %p147, %p148
    %p151 = scmp.ne.s32.totalorder %s136, %s150
    %p152 = scmp.eq.s32.totalorder %s21, 0
    %p153 = por %p151, %p152
    %s155 = sadd.s32 %s154, 1
    %p158 = scmp.eq.s32.totalorder %s15, 1
    %p159 = scmp.ne.s32.totalorder %s154, %s156
    %p160 = scmp.eq.s32.totalorder %s15, 0
    %p161 = por %p159, %p160
    %p162 = scmp.ne.s32.totalorder %s154, %s156
    %p163 = scmp.eq.s32.totalorder %s20, 1
    %p164 = por %p162, %p163
    %p165 = scmp.ne.s32.totalorder %s156, %s157
    %p166 = scmp.eq.s32.totalorder %s20, 0
    %p167 = por %p165, %p166
    %p168 = scmp.ne.s32.totalorder %s156, %s157
    %p169 = scmp.eq.s32.totalorder %s21, 1
    %p170 = por %p168, %p169
    %p172 = scmp.ne.s32.totalorder %s157, %s171
    %p173 = scmp.eq.s32.totalorder %s21, 0
    %p174 = por %p172, %p173
    %s175 = ssub.s32 %s15, %s22
    %p176 = scmp.eq.s32.totalorder %s175, 0
    %s178 = sadd.s32 %s177, 1
    %s179 = scalar_select %p176, %s177, %s178
    %p182 = pneg %p176
    %p183 = scmp.eq.s32.totalorder %s15, 1
    %p184 = por %p182, %p183
    %p185 = scmp.ne.s32.totalorder %s177, %s180
    %p186 = scmp.eq.s32.totalorder %s15, 0
    %p187 = por %p185, %p186
    %p188 = scmp.ne.s32.totalorder %s177, %s180
    %p189 = scmp.eq.s32.totalorder %s20, 1
    %p190 = por %p188, %p189
    %p191 = scmp.ne.s32.totalorder %s180, %s181
    %p192 = scmp.eq.s32.totalorder %s20, 0
    %p193 = por %p191, %p192
    %p194 = scmp.ne.s32.totalorder %s180, %s181
    %p195 = scmp.eq.s32.totalorder %s21, 1
    %p196 = por %p194, %p195
    %p198 = scmp.ne.s32.totalorder %s181, %s197
    %p199 = scmp.eq.s32.totalorder %s21, 0
    %p200 = por %p198, %p199
    %s201 = ssub.s32 %s15, %s22
    %p202 = scmp.eq.s32.totalorder %s201, 0
    %s204 = sadd.s32 %s203, 1
    %s205 = scalar_select %p202, %s203, %s204
    %p208 = pneg %p202
    %p209 = scmp.eq.s32.totalorder %s15, 1
    %p210 = por %p208, %p209
    %p211 = scmp.ne.s32.totalorder %s203, %s206
    %p212 = scmp.eq.s32.totalorder %s15, 0
    %p213 = por %p211, %p212
    %p214 = scmp.ne.s32.totalorder %s203, %s206
    %p215 = scmp.eq.s32.totalorder %s20, 1
    %p216 = por %p214, %p215
    %p217 = scmp.ne.s32.totalorder %s206, %s207
    %p218 = scmp.eq.s32.totalorder %s20, 0
    %p219 = por %p217, %p218
    %p220 = scmp.ne.s32.totalorder %s206, %s207
    %p221 = scmp.eq.s32.totalorder %s21, 1
    %p222 = por %p220, %p221
    %p224 = scmp.ne.s32.totalorder %s207, %s223
    %p225 = scmp.eq.s32.totalorder %s21, 0
    %p226 = por %p224, %p225
    %p227 = scmp.le.s32.totalorder 1, %s15
    %p228 = scmp.lt.s32.totalorder %s15, 3
    %p229 = pnand %p227, %p228
    %p230 = pneg %p229
    // Predicated region
    $region9: #{preact_bottleneck_forward.2} parent=5 // pred_check
      _
    $region10: #{preact_bottleneck_forward.2} parent=5 // pred_check_branch
      %232 = sbr.rel (%p229) target = $region12
    $region11: #{preact_bottleneck_forward.2} parent=5 // pred_region
      %s233 = ssub.s32 %s15, 1
      // Predicated region
      $region13: #{preact_bottleneck_forward.2} parent=11 // pred_check
        %p234 = pneg %p62
      $region14: #{preact_bottleneck_forward.2} parent=11 // pred_check_branch
        %236 = sbr.rel (%p234) target = $region16
      $region15: #{preact_bottleneck_forward.2} parent=11 // pred_region
        _
      $region16: #{preact_bottleneck_forward.2} parent=11 // pred_fallthru
        _
      // Predicated region
      $region17: #{preact_bottleneck_forward.2} parent=11 // pred_check
        %p237 = pneg %p83
      $region18: #{preact_bottleneck_forward.2} parent=11 // pred_check_branch
        %239 = sbr.rel (%p237) target = $region20
      $region19: #{preact_bottleneck_forward.2} parent=11 // pred_region
        _
      $region20: #{preact_bottleneck_forward.2} parent=11 // pred_fallthru
        _
      // Predicated region
      $region21: #{preact_bottleneck_forward.2} parent=11 // pred_check
        %p240 = pneg %p104
      $region22: #{preact_bottleneck_forward.2} parent=11 // pred_check_branch
        %242 = sbr.rel (%p240) target = $region24
      $region23: #{preact_bottleneck_forward.2} parent=11 // pred_region
        _
      $region24: #{preact_bottleneck_forward.2} parent=11 // pred_fallthru
        _
      // Predicated region
      $region25: #{preact_bottleneck_forward.2} parent=11 // pred_check
        %p243 = pneg %p125
      $region26: #{preact_bottleneck_forward.2} parent=11 // pred_check_branch
        %245 = sbr.rel (%p243) target = $region28
      $region27: #{preact_bottleneck_forward.2} parent=11 // pred_region
        _
      $region28: #{preact_bottleneck_forward.2} parent=11 // pred_fallthru
        _
      // Predicated region
      $region29: #{preact_bottleneck_forward.2} parent=11 // pred_check
        %p246 = pneg %p146
      $region30: #{preact_bottleneck_forward.2} parent=11 // pred_check_branch
        %248 = sbr.rel (%p246) target = $region32
      $region31: #{preact_bottleneck_forward.2} parent=11 // pred_region
        _
      $region32: #{preact_bottleneck_forward.2} parent=11 // pred_fallthru
        _
      // Predicated region
      $region33: #{preact_bottleneck_forward.2} parent=11 // pred_check
        %p249 = pneg %p167
      $region34: #{preact_bottleneck_forward.2} parent=11 // pred_check_branch
        %251 = sbr.rel (%p249) target = $region36
      $region35: #{preact_bottleneck_forward.2} parent=11 // pred_region
        _
      $region36: #{preact_bottleneck_forward.2} parent=11 // pred_fallthru
        _
    $region12: #{preact_bottleneck_forward.2} parent=5 // pred_fallthru
      _
    %p252 = scmp.lt.s32.totalorder %s15, 2
    // Predicated region
    $region37: #{preact_bottleneck_forward.2} parent=5 // pred_check
      %p253 = pneg %p252
    $region38: #{preact_bottleneck_forward.2} parent=5 // pred_check_branch
      %255 = sbr.rel (%p253) target = $region40
    $region39: #{preact_bottleneck_forward.2} parent=5 // pred_region
      // Predicated region
      $region41: #{preact_bottleneck_forward.2} parent=39 // pred_check
        %p256 = pneg %p35
      $region42: #{preact_bottleneck_forward.2} parent=39 // pred_check_branch
        %258 = sbr.rel (%p256) target = $region44
      $region43: #{preact_bottleneck_forward.2} parent=39 // pred_region
        %s259 = smul.u32 32, %s15
        %p260 = scmp.lt.s32.totalorder %s259, 63
        %s261 = scalar_select %p260, %s259, 63
        %s262 = smul.addr %s261, 8
        %s263 = scalar_lea.vmem %s0, %s262
        %s264 = smul.u32 32, %s15
      $region44: #{preact_bottleneck_forward.2} parent=39 // pred_fallthru
        _
    $region40: #{preact_bottleneck_forward.2} parent=5 // pred_fallthru
      _
    %p265 = scmp.le.s32.totalorder 1, %s15
    %p266 = scmp.lt.s32.totalorder %s15, 3
    %p267 = pnand %p265, %p266
    %p268 = pneg %p267
    // Predicated region
    $region45: #{preact_bottleneck_forward.2} parent=5 // pred_check
      _
    $region46: #{preact_bottleneck_forward.2} parent=5 // pred_check_branch
      %270 = sbr.rel (%p267) target = $region48
    $region47: #{preact_bottleneck_forward.2} parent=5 // pred_region
      %s271 = ssub.s32 %s15, 1
      %s272 = smul.u32 32, %s20
      %p273 = scmp.lt.s32.totalorder %s272, 63
      %s274 = scalar_select %p273, %s272, 63
      %s275 = smul.addr %s274, 8
      %s276 = scalar_lea.vmem %s0, %s275
      %p277 = pneg %p41
      %p278 = pneg %p38
      %p279 = pneg %p62
      %p280 = pneg %p59
      %p281 = pneg %p83
      %p282 = pneg %p80
      %p283 = pneg %p104
      %p284 = pneg %p101
      %p285 = pneg %p125
      %p286 = pneg %p122
      %p287 = pneg %p146
      %p288 = pneg %p143
      %p289 = pneg %p167
      %p290 = pneg %p164
      %p291 = pneg %p193
      %p292 = pneg %p190
      %s293 = smul.u32 32, %s20
      %p294 = scmp.lt.s32.totalorder %s293, 63
      %s295 = scalar_select %p294, %s293, 63
      %s296 = smul.addr %s295, 4
      %s297 = scalar_lea.vmem %s7, %s296
      %p298 = pneg %p219
      %p299 = pneg %p216
      %s300 = smul.u32 32, %s20
      %p301 = scmp.lt.s32.totalorder %s300, 63
      %s302 = scalar_select %p301, %s300, 63
      %s303 = smul.addr %s302, 4
      %s304 = scalar_lea.vmem %s8, %s303
      %s305 = smul.u32 32, %s20
      %p306 = scmp.lt.s32.totalorder %s305, 63
      %s307 = scalar_select %p306, %s305, 63
      %s308 = smul.addr %s307, 8
      %s309 = scalar_lea.vmem %s0, %s308
      %s310 = smul.u32 32, %s20
      %s311 = smul.u32 32, %s20
      %p312 = scmp.lt.s32.totalorder %s311, 63
      %s313 = scalar_select %p312, %s311, 63
      %s314 = smul.addr %s313, 4
      %s315 = scalar_lea.vmem %s7, %s314
      %s316 = smul.u32 32, %s20
      %s317 = smul.u32 32, %s20
      %p318 = scmp.lt.s32.totalorder %s317, 63
      %s319 = scalar_select %p318, %s317, 63
      %s320 = smul.addr %s319, 4
      %s321 = scalar_lea.vmem %s8, %s320
      %s322 = smul.u32 32, %s20
      %v324 = vld [vmem:[%s309] sm:$0xff]
      %v325 = vld [vmem:[%s309 + $0x8] sm:$0xff]
      %v326 = vld [vmem:[%s309 + $0x10] sm:$0xff]
      %v327 = vld [vmem:[%s309 + $0x18] sm:$0xff]
      %v328 = vld [vmem:[%s309 + $0x20] sm:$0xff]
      %v329 = vld [vmem:[%s309 + $0x28] sm:$0xff]
      %v330 = vld [vmem:[%s309 + $0x30] sm:$0xff]
      %v331 = vld [vmem:[%s309 + $0x38] sm:$0xff]
      %v332 = vld [vmem:[%s309 + $0x40] sm:$0xff]
      %v333 = vld [vmem:[%s309 + $0x48] sm:$0xff]
      %v334 = vld [vmem:[%s309 + $0x50] sm:$0xff]
      %v335 = vld [vmem:[%s309 + $0x58] sm:$0xff]
      %v336 = vld [vmem:[%s309 + $0x60] sm:$0xff]
      %v337 = vld [vmem:[%s309 + $0x68] sm:$0xff]
      %v338 = vld [vmem:[%s309 + $0x70] sm:$0xff]
      %v339 = vld [vmem:[%s309 + $0x78] sm:$0xff]
      %v340 = vld [vmem:[%s309 + $0x80] sm:$0xff]
      %v341 = vld [vmem:[%s309 + $0x88] sm:$0xff]
      %v342 = vld [vmem:[%s309 + $0x90] sm:$0xff]
      %v343 = vld [vmem:[%s309 + $0x98] sm:$0xff]
      %v344 = vld [vmem:[%s309 + $0xa0] sm:$0xff]
      %v345 = vld [vmem:[%s309 + $0xa8] sm:$0xff]
      %v346 = vld [vmem:[%s309 + $0xb0] sm:$0xff]
      %v347 = vld [vmem:[%s309 + $0xb8] sm:$0xff]
      %v348 = vld [vmem:[%s309 + $0xc0] sm:$0xff]
      %v349 = vld [vmem:[%s309 + $0xc8] sm:$0xff]
      %v350 = vld [vmem:[%s309 + $0xd0] sm:$0xff]
      %v351 = vld [vmem:[%s309 + $0xd8] sm:$0xff]
      %v352 = vld [vmem:[%s309 + $0xe0] sm:$0xff]
      %v353 = vld [vmem:[%s309 + $0xe8] sm:$0xff]
      %v354 = vld [vmem:[%s309 + $0xf0] sm:$0xff]
      %v355 = vld [vmem:[%s309 + $0xf8] sm:$0xff]
      %v356 = vld [vmem:[%s1] sm:$0x1]
      %v358 = vlaneseq
      %v359 = vshrl.u32 %v358, 7
      %v360 = vsub.s32 0, %v359
      %v361 = vrot.slane %v356, %v360
      %v363 = vmul.f32 %v324, %v361
      %v364 = vmul.f32 %v325, %v361
      %v365 = vmul.f32 %v326, %v361
      %v366 = vmul.f32 %v327, %v361
      %v367 = vmul.f32 %v328, %v361
      %v368 = vmul.f32 %v329, %v361
      %v369 = vmul.f32 %v330, %v361
      %v370 = vmul.f32 %v331, %v361
      %v371 = vmul.f32 %v332, %v361
      %v372 = vmul.f32 %v333, %v361
      %v373 = vmul.f32 %v334, %v361
      %v374 = vmul.f32 %v335, %v361
      %v375 = vmul.f32 %v336, %v361
      %v376 = vmul.f32 %v337, %v361
      %v377 = vmul.f32 %v338, %v361
      %v378 = vmul.f32 %v339, %v361
      %v379 = vmul.f32 %v340, %v361
      %v380 = vmul.f32 %v341, %v361
      %v381 = vmul.f32 %v342, %v361
      %v382 = vmul.f32 %v343, %v361
      %v383 = vmul.f32 %v344, %v361
      %v384 = vmul.f32 %v345, %v361
      %v385 = vmul.f32 %v346, %v361
      %v386 = vmul.f32 %v347, %v361
      %v387 = vmul.f32 %v348, %v361
      %v388 = vmul.f32 %v349, %v361
      %v389 = vmul.f32 %v350, %v361
      %v390 = vmul.f32 %v351, %v361
      %v391 = vmul.f32 %v352, %v361
      %v392 = vmul.f32 %v353, %v361
      %v393 = vmul.f32 %v354, %v361
      %v394 = vmul.f32 %v355, %v361
      %v395 = vld [vmem:[%s2] sm:$0x1]
      %v397 = vlaneseq
      %v398 = vshrl.u32 %v397, 7
      %v399 = vsub.s32 0, %v398
      %v400 = vrot.slane %v395, %v399
      %v402 = vadd.f32 %v363, %v400
      %v403 = vadd.f32 %v364, %v400
      %v404 = vadd.f32 %v365, %v400
      %v405 = vadd.f32 %v366, %v400
      %v406 = vadd.f32 %v367, %v400
      %v407 = vadd.f32 %v368, %v400
      %v408 = vadd.f32 %v369, %v400
      %v409 = vadd.f32 %v370, %v400
      %v410 = vadd.f32 %v371, %v400
      %v411 = vadd.f32 %v372, %v400
      %v412 = vadd.f32 %v373, %v400
      %v413 = vadd.f32 %v374, %v400
      %v414 = vadd.f32 %v375, %v400
      %v415 = vadd.f32 %v376, %v400
      %v416 = vadd.f32 %v377, %v400
      %v417 = vadd.f32 %v378, %v400
      %v418 = vadd.f32 %v379, %v400
      %v419 = vadd.f32 %v380, %v400
      %v420 = vadd.f32 %v381, %v400
      %v421 = vadd.f32 %v382, %v400
      %v422 = vadd.f32 %v383, %v400
      %v423 = vadd.f32 %v384, %v400
      %v424 = vadd.f32 %v385, %v400
      %v425 = vadd.f32 %v386, %v400
      %v426 = vadd.f32 %v387, %v400
      %v427 = vadd.f32 %v388, %v400
      %v428 = vadd.f32 %v389, %v400
      %v429 = vadd.f32 %v390, %v400
      %v430 = vadd.f32 %v391, %v400
      %v431 = vadd.f32 %v392, %v400
      %v432 = vadd.f32 %v393, %v400
      %v433 = vadd.f32 %v394, %v400
      %v434 = vmax.f32 %v402, 0.0
      %v435 = vmax.f32 %v403, 0.0
      %v436 = vmax.f32 %v404, 0.0
      %v437 = vmax.f32 %v405, 0.0
      %v438 = vmax.f32 %v406, 0.0
      %v439 = vmax.f32 %v407, 0.0
      %v440 = vmax.f32 %v408, 0.0
      %v441 = vmax.f32 %v409, 0.0
      %v442 = vmax.f32 %v410, 0.0
      %v443 = vmax.f32 %v411, 0.0
      %v444 = vmax.f32 %v412, 0.0
      %v445 = vmax.f32 %v413, 0.0
      %v446 = vmax.f32 %v414, 0.0
      %v447 = vmax.f32 %v415, 0.0
      %v448 = vmax.f32 %v416, 0.0
      %v449 = vmax.f32 %v417, 0.0
      %v450 = vmax.f32 %v418, 0.0
      %v451 = vmax.f32 %v419, 0.0
      %v452 = vmax.f32 %v420, 0.0
      %v453 = vmax.f32 %v421, 0.0
      %v454 = vmax.f32 %v422, 0.0
      %v455 = vmax.f32 %v423, 0.0
      %v456 = vmax.f32 %v424, 0.0
      %v457 = vmax.f32 %v425, 0.0
      %v458 = vmax.f32 %v426, 0.0
      %v459 = vmax.f32 %v427, 0.0
      %v460 = vmax.f32 %v428, 0.0
      %v461 = vmax.f32 %v429, 0.0
      %v462 = vmax.f32 %v430, 0.0
      %v463 = vmax.f32 %v431, 0.0
      %v464 = vmax.f32 %v432, 0.0
      %v465 = vmax.f32 %v433, 0.0
      %v466 = vpack.c.bf16 %v435, %v434
      %v467 = vpack.c.bf16 %v437, %v436
      %v468 = vpack.c.bf16 %v439, %v438
      %v469 = vpack.c.bf16 %v441, %v440
      %v470 = vpack.c.bf16 %v443, %v442
      %v471 = vpack.c.bf16 %v445, %v444
      %v472 = vpack.c.bf16 %v447, %v446
      %v473 = vpack.c.bf16 %v449, %v448
      %v474 = vpack.c.bf16 %v451, %v450
      %v475 = vpack.c.bf16 %v453, %v452
      %v476 = vpack.c.bf16 %v455, %v454
      %v477 = vpack.c.bf16 %v457, %v456
      %v478 = vpack.c.bf16 %v459, %v458
      %v479 = vpack.c.bf16 %v461, %v460
      %v480 = vpack.c.bf16 %v463, %v462
      %v481 = vpack.c.bf16 %v465, %v464
      %v482 = vld [vmem:[%s3] sm:$0x3]
      %vm483 = vcmask 31744
      %v485 = vsel %vm483, %v466, 0
      %v488 = vsel %vm483, %v467, 0
      %v491 = vsel %vm483, %v468, 0
      %v494 = vsel %vm483, %v469, 0
      %v497 = vsel %vm483, %v470, 0
      %v500 = vsel %vm483, %v471, 0
      %v503 = vsel %vm483, %v472, 0
      %v506 = vsel %vm483, %v473, 0
      %v509 = vsel %vm483, %v474, 0
      %v512 = vsel %vm483, %v475, 0
      %v515 = vsel %vm483, %v476, 0
      %v518 = vsel %vm483, %v477, 0
      %v521 = vsel %vm483, %v478, 0
      %v524 = vsel %vm483, %v479, 0
      %v527 = vsel %vm483, %v480, 0
      %v530 = vsel %vm483, %v481, 0
      %vm532 = vcmask 1041408
      %v534 = vsel %vm532, %v482, 0
      %536 = vmatprep.subr.bf16.mxu0 0
      %537 = vmatpush1.bf16.msra.mxu0 0
      %538 = vmatprep.subr.bf16.mxu0 0
      %539 = vmatpush1.bf16.msra.mxu0 0
      %540 = vmatprep.subr.bf16.mxu0 0
      %541 = vmatpush1.bf16.msra.mxu0 0
      %542 = vmatprep.subr.bf16.mxu0 0
      %543 = vmatpush1.bf16.msra.mxu0 0
      %544 = vmatprep.subr.bf16.mxu0 0
      %545 = vmatpush1.bf16.msra.mxu0 0
      %546 = vmatprep.subr.bf16.mxu0 0
      %547 = vmatpush1.bf16.msra.mxu0 0
      %548 = vmatprep.subr.bf16.mxu0 0
      %549 = vmatpush1.bf16.msra.mxu0 0
      %550 = vmatprep.subr.bf16.mxu0 0
      %551 = vmatpush1.bf16.msra.mxu0 %v534
      %552 = vmatprep.subr.bf16.mxu0 0
      %553 = vmatpush2.bf16.msra.mxu0 0
      %554 = vmatprep.subr.bf16.mxu0 0
      %555 = vmatpush2.bf16.msra.mxu0 0
      %556 = vmatprep.subr.bf16.mxu0 0
      %557 = vmatpush2.bf16.msra.mxu0 0
      %558 = vmatprep.subr.bf16.mxu0 0
      %559 = vmatpush2.bf16.msra.mxu0 0
      %560 = vmatprep.subr.bf16.mxu0 0
      %561 = vmatpush2.bf16.msra.mxu0 0
      %562 = vmatprep.subr.bf16.mxu0 0
      %563 = vmatpush2.bf16.msra.mxu0 0
      %564 = vmatprep.subr.bf16.mxu0 0
      %565 = vmatpush2.bf16.msra.mxu0 0
      %566 = vmatprep.subr.bf16.mxu0 0
      %567 = vmatpush2.bf16.msra.mxu0 0
      %568 = vmatprep.mubr.bf16.mxu0 0
      %569 = vmatmul.mubr.bf16.gmra.mxu0 %v485
      %v570 = vpop.f32.mrf.mxu0
      %v571 = vadd.f32 0.0, %v570
      %v572 = vpop.f32.mrf.mxu0
      %v573 = vpop.f32.mrf.mxu0
      %v574 = vadd.f32 0.0, %v573
      %v575 = vpop.f32.mrf.mxu0
      %576 = vmatprep.mubr.bf16.mxu0 0
      %577 = vmatmul.mubr.bf16.gmra.mxu0 %v488
      %v578 = vpop.f32.mrf.mxu0
      %v579 = vadd.f32 0.0, %v578
      %v580 = vpop.f32.mrf.mxu0
      %v581 = vpop.f32.mrf.mxu0
      %v582 = vadd.f32 0.0, %v581
      %v583 = vpop.f32.mrf.mxu0
      %584 = vmatprep.mubr.bf16.mxu0 0
      %585 = vmatmul.mubr.bf16.gmra.mxu0 %v491
      %v586 = vpop.f32.mrf.mxu0
      %v587 = vadd.f32 0.0, %v586
      %v588 = vpop.f32.mrf.mxu0
      %v589 = vpop.f32.mrf.mxu0
      %v590 = vadd.f32 0.0, %v589
      %v591 = vpop.f32.mrf.mxu0
      %592 = vmatprep.mubr.bf16.mxu0 0
      %593 = vmatmul.mubr.bf16.gmra.mxu0 %v494
      %v594 = vpop.f32.mrf.mxu0
      %v595 = vadd.f32 0.0, %v594
      %v596 = vpop.f32.mrf.mxu0
      %v597 = vpop.f32.mrf.mxu0
      %v598 = vadd.f32 0.0, %v597
      %v599 = vpop.f32.mrf.mxu0
      %600 = vmatprep.mubr.bf16.mxu0 0
      %601 = vmatmul.mubr.bf16.gmra.mxu0 %v497
      %v602 = vpop.f32.mrf.mxu0
      %v603 = vadd.f32 0.0, %v602
      %v604 = vpop.f32.mrf.mxu0
      %v605 = vpop.f32.mrf.mxu0
      %v606 = vadd.f32 0.0, %v605
      %v607 = vpop.f32.mrf.mxu0
      %608 = vmatprep.mubr.bf16.mxu0 0
      %609 = vmatmul.mubr.bf16.gmra.mxu0 %v500
      %v610 = vpop.f32.mrf.mxu0
      %v611 = vadd.f32 0.0, %v610
      %v612 = vpop.f32.mrf.mxu0
      %v613 = vpop.f32.mrf.mxu0
      %v614 = vadd.f32 0.0, %v613
      %v615 = vpop.f32.mrf.mxu0
      %616 = vmatprep.mubr.bf16.mxu0 0
      %617 = vmatmul.mubr.bf16.gmra.mxu0 %v503
      %v618 = vpop.f32.mrf.mxu0
      %v619 = vadd.f32 0.0, %v618
      %v620 = vpop.f32.mrf.mxu0
      %v621 = vpop.f32.mrf.mxu0
      %v622 = vadd.f32 0.0, %v621
      %v623 = vpop.f32.mrf.mxu0
      %624 = vmatprep.mubr.bf16.mxu0 0
      %625 = vmatmul.mubr.bf16.gmra.mxu0 %v506
      %v626 = vpop.f32.mrf.mxu0
      %v627 = vadd.f32 0.0, %v626
      %v628 = vpop.f32.mrf.mxu0
      %v629 = vpop.f32.mrf.mxu0
      %v630 = vadd.f32 0.0, %v629
      %v631 = vpop.f32.mrf.mxu0
      %632 = vmatprep.mubr.bf16.mxu0 0
      %633 = vmatmul.mubr.bf16.gmra.mxu0 %v509
      %v634 = vpop.f32.mrf.mxu0
      %v635 = vadd.f32 0.0, %v634
      %v636 = vpop.f32.mrf.mxu0
      %v637 = vpop.f32.mrf.mxu0
      %v638 = vadd.f32 0.0, %v637
      %v639 = vpop.f32.mrf.mxu0
      %640 = vmatprep.mubr.bf16.mxu0 0
      %641 = vmatmul.mubr.bf16.gmra.mxu0 %v512
      %v642 = vpop.f32.mrf.mxu0
      %v643 = vadd.f32 0.0, %v642
      %v644 = vpop.f32.mrf.mxu0
      %v645 = vpop.f32.mrf.mxu0
      %v646 = vadd.f32 0.0, %v645
      %v647 = vpop.f32.mrf.mxu0
      %648 = vmatprep.mubr.bf16.mxu0 0
      %649 = vmatmul.mubr.bf16.gmra.mxu0 %v515
      %v650 = vpop.f32.mrf.mxu0
      %v651 = vadd.f32 0.0, %v650
      %v652 = vpop.f32.mrf.mxu0
      %v653 = vpop.f32.mrf.mxu0
      %v654 = vadd.f32 0.0, %v653
      %v655 = vpop.f32.mrf.mxu0
      %656 = vmatprep.mubr.bf16.mxu0 0
      %657 = vmatmul.mubr.bf16.gmra.mxu0 %v518
      %v658 = vpop.f32.mrf.mxu0
      %v659 = vadd.f32 0.0, %v658
      %v660 = vpop.f32.mrf.mxu0
      %v661 = vpop.f32.mrf.mxu0
      %v662 = vadd.f32 0.0, %v661
      %v663 = vpop.f32.mrf.mxu0
      %664 = vmatprep.mubr.bf16.mxu0 0
      %665 = vmatmul.mubr.bf16.gmra.mxu0 %v521
      %v666 = vpop.f32.mrf.mxu0
      %v667 = vadd.f32 0.0, %v666
      %v668 = vpop.f32.mrf.mxu0
      %v669 = vpop.f32.mrf.mxu0
      %v670 = vadd.f32 0.0, %v669
      %v671 = vpop.f32.mrf.mxu0
      %672 = vmatprep.mubr.bf16.mxu0 0
      %673 = vmatmul.mubr.bf16.gmra.mxu0 %v524
      %v674 = vpop.f32.mrf.mxu0
      %v675 = vadd.f32 0.0, %v674
      %v676 = vpop.f32.mrf.mxu0
      %v677 = vpop.f32.mrf.mxu0
      %v678 = vadd.f32 0.0, %v677
      %v679 = vpop.f32.mrf.mxu0
      %680 = vmatprep.mubr.bf16.mxu0 0
      %681 = vmatmul.mubr.bf16.gmra.mxu0 %v527
      %v682 = vpop.f32.mrf.mxu0
      %v683 = vadd.f32 0.0, %v682
      %v684 = vpop.f32.mrf.mxu0
      %v685 = vpop.f32.mrf.mxu0
      %v686 = vadd.f32 0.0, %v685
      %v687 = vpop.f32.mrf.mxu0
      %688 = vmatprep.mubr.bf16.mxu0 0
      %689 = vmatmul.mubr.bf16.gmra.mxu0 %v530
      %v690 = vpop.f32.mrf.mxu0
      %v691 = vadd.f32 0.0, %v690
      %v692 = vpop.f32.mrf.mxu0
      %v693 = vpop.f32.mrf.mxu0
      %v694 = vadd.f32 0.0, %v693
      %v695 = vpop.f32.mrf.mxu0
      %696 = vdwg.mxu0
      %v697 = vld [vmem:[%s4] sm:$0x1]
      %v699 = vlaneseq
      %v700 = vshrl.u32 %v699, 7
      %v701 = vsub.s32 0, %v700
      %v702 = vrot.slane %v697, %v701
      %v704 = vmul.f32 %v571, %v702
      %v705 = vmul.f32 %v574, %v702
      %v706 = vmul.f32 %v579, %v702
      %v707 = vmul.f32 %v582, %v702
      %v708 = vmul.f32 %v587, %v702
      %v709 = vmul.f32 %v590, %v702
      %v710 = vmul.f32 %v595, %v702
      %v711 = vmul.f32 %v598, %v702
      %v712 = vmul.f32 %v603, %v702
      %v713 = vmul.f32 %v606, %v702
      %v714 = vmul.f32 %v611, %v702
      %v715 = vmul.f32 %v614, %v702
      %v716 = vmul.f32 %v619, %v702
      %v717 = vmul.f32 %v622, %v702
      %v718 = vmul.f32 %v627, %v702
      %v719 = vmul.f32 %v630, %v702
      %v720 = vmul.f32 %v635, %v702
      %v721 = vmul.f32 %v638, %v702
      %v722 = vmul.f32 %v643, %v702
      %v723 = vmul.f32 %v646, %v702
      %v724 = vmul.f32 %v651, %v702
      %v725 = vmul.f32 %v654, %v702
      %v726 = vmul.f32 %v659, %v702
      %v727 = vmul.f32 %v662, %v702
      %v728 = vmul.f32 %v667, %v702
      %v729 = vmul.f32 %v670, %v702
      %v730 = vmul.f32 %v675, %v702
      %v731 = vmul.f32 %v678, %v702
      %v732 = vmul.f32 %v683, %v702
      %v733 = vmul.f32 %v686, %v702
      %v734 = vmul.f32 %v691, %v702
      %v735 = vmul.f32 %v694, %v702
      %v736 = vld [vmem:[%s5] sm:$0x1]
      %v738 = vlaneseq
      %v739 = vshrl.u32 %v738, 7
      %v740 = vsub.s32 0, %v739
      %v741 = vrot.slane %v736, %v740
      %v743 = vadd.f32 %v704, %v741
      %v744 = vadd.f32 %v705, %v741
      %v745 = vadd.f32 %v706, %v741
      %v746 = vadd.f32 %v707, %v741
      %v747 = vadd.f32 %v708, %v741
      %v748 = vadd.f32 %v709, %v741
      %v749 = vadd.f32 %v710, %v741
      %v750 = vadd.f32 %v711, %v741
      %v751 = vadd.f32 %v712, %v741
      %v752 = vadd.f32 %v713, %v741
      %v753 = vadd.f32 %v714, %v741
      %v754 = vadd.f32 %v715, %v741
      %v755 = vadd.f32 %v716, %v741
      %v756 = vadd.f32 %v717, %v741
      %v757 = vadd.f32 %v718, %v741
      %v758 = vadd.f32 %v719, %v741
      %v759 = vadd.f32 %v720, %v741
      %v760 = vadd.f32 %v721, %v741
      %v761 = vadd.f32 %v722, %v741
      %v762 = vadd.f32 %v723, %v741
      %v763 = vadd.f32 %v724, %v741
      %v764 = vadd.f32 %v725, %v741
      %v765 = vadd.f32 %v726, %v741
      %v766 = vadd.f32 %v727, %v741
      %v767 = vadd.f32 %v728, %v741
      %v768 = vadd.f32 %v729, %v741
      %v769 = vadd.f32 %v730, %v741
      %v770 = vadd.f32 %v731, %v741
      %v771 = vadd.f32 %v732, %v741
      %v772 = vadd.f32 %v733, %v741
      %v773 = vadd.f32 %v734, %v741
      %v774 = vadd.f32 %v735, %v741
      %v775 = vmax.f32 %v743, 0.0
      %v776 = vmax.f32 %v744, 0.0
      %v777 = vmax.f32 %v745, 0.0
      %v778 = vmax.f32 %v746, 0.0
      %v779 = vmax.f32 %v747, 0.0
      %v780 = vmax.f32 %v748, 0.0
      %v781 = vmax.f32 %v749, 0.0
      %v782 = vmax.f32 %v750, 0.0
      %v783 = vmax.f32 %v751, 0.0
      %v784 = vmax.f32 %v752, 0.0
      %v785 = vmax.f32 %v753, 0.0
      %v786 = vmax.f32 %v754, 0.0
      %v787 = vmax.f32 %v755, 0.0
      %v788 = vmax.f32 %v756, 0.0
      %v789 = vmax.f32 %v757, 0.0
      %v790 = vmax.f32 %v758, 0.0
      %v791 = vmax.f32 %v759, 0.0
      %v792 = vmax.f32 %v760, 0.0
      %v793 = vmax.f32 %v761, 0.0
      %v794 = vmax.f32 %v762, 0.0
      %v795 = vmax.f32 %v763, 0.0
      %v796 = vmax.f32 %v764, 0.0
      %v797 = vmax.f32 %v765, 0.0
      %v798 = vmax.f32 %v766, 0.0
      %v799 = vmax.f32 %v767, 0.0
      %v800 = vmax.f32 %v768, 0.0
      %v801 = vmax.f32 %v769, 0.0
      %v802 = vmax.f32 %v770, 0.0
      %v803 = vmax.f32 %v771, 0.0
      %v804 = vmax.f32 %v772, 0.0
      %v805 = vmax.f32 %v773, 0.0
      %v806 = vmax.f32 %v774, 0.0
      %v807 = vpack.c.bf16 %v776, %v775
      %v808 = vpack.c.bf16 %v778, %v777
      %v809 = vpack.c.bf16 %v780, %v779
      %v810 = vpack.c.bf16 %v782, %v781
      %v811 = vpack.c.bf16 %v784, %v783
      %v812 = vpack.c.bf16 %v786, %v785
      %v813 = vpack.c.bf16 %v788, %v787
      %v814 = vpack.c.bf16 %v790, %v789
      %v815 = vpack.c.bf16 %v792, %v791
      %v816 = vpack.c.bf16 %v794, %v793
      %v817 = vpack.c.bf16 %v796, %v795
      %v818 = vpack.c.bf16 %v798, %v797
      %v819 = vpack.c.bf16 %v800, %v799
      %v820 = vpack.c.bf16 %v802, %v801
      %v821 = vpack.c.bf16 %v804, %v803
      %v822 = vpack.c.bf16 %v806, %v805
      %v839 = vunpack.c.l.b16 %v807
      %v840 = vunpack.c.h.b16 %v807
      %v841 = vunpack.c.l.b16 %v808
      %v842 = vunpack.c.h.b16 %v808
      %v843 = vunpack.c.l.b16 %v809
      %v844 = vunpack.c.h.b16 %v809
      %v845 = vunpack.c.l.b16 %v810
      %v846 = vunpack.c.h.b16 %v810
      %v847 = vunpack.c.l.b16 %v811
      %v848 = vunpack.c.h.b16 %v811
      %v849 = vunpack.c.l.b16 %v812
      %v850 = vunpack.c.h.b16 %v812
      %v851 = vunpack.c.l.b16 %v813
      %v852 = vunpack.c.h.b16 %v813
      %v853 = vunpack.c.l.b16 %v814
      %v854 = vunpack.c.h.b16 %v814
      %v855 = vunpack.c.l.b16 %v815
      %v856 = vunpack.c.h.b16 %v815
      %v857 = vunpack.c.l.b16 %v816
      %v858 = vunpack.c.h.b16 %v816
      %v859 = vunpack.c.l.b16 %v817
      %v860 = vunpack.c.h.b16 %v817
      %v861 = vunpack.c.l.b16 %v818
      %v862 = vunpack.c.h.b16 %v818
      %v863 = vunpack.c.l.b16 %v819
      %v864 = vunpack.c.h.b16 %v819
      %v865 = vunpack.c.l.b16 %v820
      %v866 = vunpack.c.h.b16 %v820
      %v867 = vunpack.c.l.b16 %v821
      %v868 = vunpack.c.h.b16 %v821
      %v869 = vunpack.c.l.b16 %v822
      %v870 = vunpack.c.h.b16 %v822
      %v871 = vpack.c.b16 %v839, %v839
      %v872 = vpack.c.b16 %v840, %v840
      %v873 = vpack.c.b16 %v841, %v841
      %v874 = vpack.c.b16 %v842, %v842
      %v875 = vpack.c.b16 %v843, %v843
      %v876 = vpack.c.b16 %v844, %v844
      %v877 = vpack.c.b16 %v845, %v845
      %v878 = vpack.c.b16 %v846, %v846
      %v879 = vpack.c.b16 %v847, %v847
      %v880 = vpack.c.b16 %v848, %v848
      %v881 = vpack.c.b16 %v849, %v849
      %v882 = vpack.c.b16 %v850, %v850
      %v883 = vpack.c.b16 %v851, %v851
      %v884 = vpack.c.b16 %v852, %v852
      %v885 = vpack.c.b16 %v853, %v853
      %v886 = vpack.c.b16 %v854, %v854
      %v887 = vpack.c.b16 %v855, %v855
      %v888 = vpack.c.b16 %v856, %v856
      %v889 = vpack.c.b16 %v857, %v857
      %v890 = vpack.c.b16 %v858, %v858
      %v891 = vpack.c.b16 %v859, %v859
      %v892 = vpack.c.b16 %v860, %v860
      %v893 = vpack.c.b16 %v861, %v861
      %v894 = vpack.c.b16 %v862, %v862
      %v895 = vpack.c.b16 %v863, %v863
      %v896 = vpack.c.b16 %v864, %v864
      %v897 = vpack.c.b16 %v865, %v865
      %v898 = vpack.c.b16 %v866, %v866
      %v899 = vpack.c.b16 %v867, %v867
      %v900 = vpack.c.b16 %v868, %v868
      %v901 = vpack.c.b16 %v869, %v869
      %v902 = vpack.c.b16 %v870, %v870
      %vm935 = vcmask 27648
      %936 = vst.msk [vmem:[%s315] sm:$0xf] %vm935, %v871
      %937 = vst.msk [vmem:[%s315 + $0x4] sm:$0xf] %vm935, %v872
      %938 = vst.msk [vmem:[%s315 + $0x8] sm:$0xf] %vm935, %v873
      %939 = vst.msk [vmem:[%s315 + $0xc] sm:$0xf] %vm935, %v874
      %940 = vst.msk [vmem:[%s315 + $0x10] sm:$0xf] %vm935, %v875
      %941 = vst.msk [vmem:[%s315 + $0x14] sm:$0xf] %vm935, %v876
      %942 = vst.msk [vmem:[%s315 + $0x18] sm:$0xf] %vm935, %v877
      %943 = vst.msk [vmem:[%s315 + $0x1c] sm:$0xf] %vm935, %v878
      %944 = vst.msk [vmem:[%s315 + $0x20] sm:$0xf] %vm935, %v879
      %945 = vst.msk [vmem:[%s315 + $0x24] sm:$0xf] %vm935, %v880
      %946 = vst.msk [vmem:[%s315 + $0x28] sm:$0xf] %vm935, %v881
      %947 = vst.msk [vmem:[%s315 + $0x2c] sm:$0xf] %vm935, %v882
      %948 = vst.msk [vmem:[%s315 + $0x30] sm:$0xf] %vm935, %v883
      %949 = vst.msk [vmem:[%s315 + $0x34] sm:$0xf] %vm935, %v884
      %950 = vst.msk [vmem:[%s315 + $0x38] sm:$0xf] %vm935, %v885
      %951 = vst.msk [vmem:[%s315 + $0x3c] sm:$0xf] %vm935, %v886
      %952 = vst.msk [vmem:[%s315 + $0x40] sm:$0xf] %vm935, %v887
      %953 = vst.msk [vmem:[%s315 + $0x44] sm:$0xf] %vm935, %v888
      %954 = vst.msk [vmem:[%s315 + $0x48] sm:$0xf] %vm935, %v889
      %955 = vst.msk [vmem:[%s315 + $0x4c] sm:$0xf] %vm935, %v890
      %956 = vst.msk [vmem:[%s315 + $0x50] sm:$0xf] %vm935, %v891
      %957 = vst.msk [vmem:[%s315 + $0x54] sm:$0xf] %vm935, %v892
      %958 = vst.msk [vmem:[%s315 + $0x58] sm:$0xf] %vm935, %v893
      %959 = vst.msk [vmem:[%s315 + $0x5c] sm:$0xf] %vm935, %v894
      %960 = vst.msk [vmem:[%s315 + $0x60] sm:$0xf] %vm935, %v895
      %961 = vst.msk [vmem:[%s315 + $0x64] sm:$0xf] %vm935, %v896
      %962 = vst.msk [vmem:[%s315 + $0x68] sm:$0xf] %vm935, %v897
      %963 = vst.msk [vmem:[%s315 + $0x6c] sm:$0xf] %vm935, %v898
      %964 = vst.msk [vmem:[%s315 + $0x70] sm:$0xf] %vm935, %v899
      %965 = vst.msk [vmem:[%s315 + $0x74] sm:$0xf] %vm935, %v900
      %966 = vst.msk [vmem:[%s315 + $0x78] sm:$0xf] %vm935, %v901
      %967 = vst.msk [vmem:[%s315 + $0x7c] sm:$0xf] %vm935, %v902
      %v968 = vld [vmem:[%s6] sm:$0x3]
      %v970 = vsel %vm532, %v968, 0
      %972 = vmatprep.subr.bf16.mxu0 0
      %973 = vmatpush1.bf16.msra.mxu0 0
      %974 = vmatprep.subr.bf16.mxu0 0
      %975 = vmatpush1.bf16.msra.mxu0 0
      %976 = vmatprep.subr.bf16.mxu0 0
      %977 = vmatpush1.bf16.msra.mxu0 0
      %978 = vmatprep.subr.bf16.mxu0 0
      %979 = vmatpush1.bf16.msra.mxu0 0
      %980 = vmatprep.subr.bf16.mxu0 0
      %981 = vmatpush1.bf16.msra.mxu0 0
      %982 = vmatprep.subr.bf16.mxu0 0
      %983 = vmatpush1.bf16.msra.mxu0 0
      %984 = vmatprep.subr.bf16.mxu0 0
      %985 = vmatpush1.bf16.msra.mxu0 0
      %986 = vmatprep.subr.bf16.mxu0 0
      %987 = vmatpush1.bf16.msra.mxu0 %v970
      %988 = vmatprep.subr.bf16.mxu0 0
      %989 = vmatpush2.bf16.msra.mxu0 0
      %990 = vmatprep.subr.bf16.mxu0 0
      %991 = vmatpush2.bf16.msra.mxu0 0
      %992 = vmatprep.subr.bf16.mxu0 0
      %993 = vmatpush2.bf16.msra.mxu0 0
      %994 = vmatprep.subr.bf16.mxu0 0
      %995 = vmatpush2.bf16.msra.mxu0 0
      %996 = vmatprep.subr.bf16.mxu0 0
      %997 = vmatpush2.bf16.msra.mxu0 0
      %998 = vmatprep.subr.bf16.mxu0 0
      %999 = vmatpush2.bf16.msra.mxu0 0
      %1000 = vmatprep.subr.bf16.mxu0 0
      %1001 = vmatpush2.bf16.msra.mxu0 0
      %1002 = vmatprep.subr.bf16.mxu0 0
      %1003 = vmatpush2.bf16.msra.mxu0 0
      %1004 = vmatprep.mubr.bf16.mxu0 0
      %1005 = vmatmul.mubr.bf16.gmra.mxu0 %v485
      %v1006 = vpop.f32.mrf.mxu0
      %v1007 = vadd.f32 0.0, %v1006
      %v1008 = vpop.f32.mrf.mxu0
      %v1009 = vpop.f32.mrf.mxu0
      %v1010 = vadd.f32 0.0, %v1009
      %v1011 = vpop.f32.mrf.mxu0
      %1012 = vmatprep.mubr.bf16.mxu0 0
      %1013 = vmatmul.mubr.bf16.gmra.mxu0 %v488
      %v1014 = vpop.f32.mrf.mxu0
      %v1015 = vadd.f32 0.0, %v1014
      %v1016 = vpop.f32.mrf.mxu0
      %v1017 = vpop.f32.mrf.mxu0
      %v1018 = vadd.f32 0.0, %v1017
      %v1019 = vpop.f32.mrf.mxu0
      %1020 = vmatprep.mubr.bf16.mxu0 0
      %1021 = vmatmul.mubr.bf16.gmra.mxu0 %v491
      %v1022 = vpop.f32.mrf.mxu0
      %v1023 = vadd.f32 0.0, %v1022
      %v1024 = vpop.f32.mrf.mxu0
      %v1025 = vpop.f32.mrf.mxu0
      %v1026 = vadd.f32 0.0, %v1025
      %v1027 = vpop.f32.mrf.mxu0
      %1028 = vmatprep.mubr.bf16.mxu0 0
      %1029 = vmatmul.mubr.bf16.gmra.mxu0 %v494
      %v1030 = vpop.f32.mrf.mxu0
      %v1031 = vadd.f32 0.0, %v1030
      %v1032 = vpop.f32.mrf.mxu0
      %v1033 = vpop.f32.mrf.mxu0
      %v1034 = vadd.f32 0.0, %v1033
      %v1035 = vpop.f32.mrf.mxu0
      %1036 = vmatprep.mubr.bf16.mxu0 0
      %1037 = vmatmul.mubr.bf16.gmra.mxu0 %v497
      %v1038 = vpop.f32.mrf.mxu0
      %v1039 = vadd.f32 0.0, %v1038
      %v1040 = vpop.f32.mrf.mxu0
      %v1041 = vpop.f32.mrf.mxu0
      %v1042 = vadd.f32 0.0, %v1041
      %v1043 = vpop.f32.mrf.mxu0
      %1044 = vmatprep.mubr.bf16.mxu0 0
      %1045 = vmatmul.mubr.bf16.gmra.mxu0 %v500
      %v1046 = vpop.f32.mrf.mxu0
      %v1047 = vadd.f32 0.0, %v1046
      %v1048 = vpop.f32.mrf.mxu0
      %v1049 = vpop.f32.mrf.mxu0
      %v1050 = vadd.f32 0.0, %v1049
      %v1051 = vpop.f32.mrf.mxu0
      %1052 = vmatprep.mubr.bf16.mxu0 0
      %1053 = vmatmul.mubr.bf16.gmra.mxu0 %v503
      %v1054 = vpop.f32.mrf.mxu0
      %v1055 = vadd.f32 0.0, %v1054
      %v1056 = vpop.f32.mrf.mxu0
      %v1057 = vpop.f32.mrf.mxu0
      %v1058 = vadd.f32 0.0, %v1057
      %v1059 = vpop.f32.mrf.mxu0
      %1060 = vmatprep.mubr.bf16.mxu0 0
      %1061 = vmatmul.mubr.bf16.gmra.mxu0 %v506
      %v1062 = vpop.f32.mrf.mxu0
      %v1063 = vadd.f32 0.0, %v1062
      %v1064 = vpop.f32.mrf.mxu0
      %v1065 = vpop.f32.mrf.mxu0
      %v1066 = vadd.f32 0.0, %v1065
      %v1067 = vpop.f32.mrf.mxu0
      %1068 = vmatprep.mubr.bf16.mxu0 0
      %1069 = vmatmul.mubr.bf16.gmra.mxu0 %v509
      %v1070 = vpop.f32.mrf.mxu0
      %v1071 = vadd.f32 0.0, %v1070
      %v1072 = vpop.f32.mrf.mxu0
      %v1073 = vpop.f32.mrf.mxu0
      %v1074 = vadd.f32 0.0, %v1073
      %v1075 = vpop.f32.mrf.mxu0
      %1076 = vmatprep.mubr.bf16.mxu0 0
      %1077 = vmatmul.mubr.bf16.gmra.mxu0 %v512
      %v1078 = vpop.f32.mrf.mxu0
      %v1079 = vadd.f32 0.0, %v1078
      %v1080 = vpop.f32.mrf.mxu0
      %v1081 = vpop.f32.mrf.mxu0
      %v1082 = vadd.f32 0.0, %v1081
      %v1083 = vpop.f32.mrf.mxu0
      %1084 = vmatprep.mubr.bf16.mxu0 0
      %1085 = vmatmul.mubr.bf16.gmra.mxu0 %v515
      %v1086 = vpop.f32.mrf.mxu0
      %v1087 = vadd.f32 0.0, %v1086
      %v1088 = vpop.f32.mrf.mxu0
      %v1089 = vpop.f32.mrf.mxu0
      %v1090 = vadd.f32 0.0, %v1089
      %v1091 = vpop.f32.mrf.mxu0
      %1092 = vmatprep.mubr.bf16.mxu0 0
      %1093 = vmatmul.mubr.bf16.gmra.mxu0 %v518
      %v1094 = vpop.f32.mrf.mxu0
      %v1095 = vadd.f32 0.0, %v1094
      %v1096 = vpop.f32.mrf.mxu0
      %v1097 = vpop.f32.mrf.mxu0
      %v1098 = vadd.f32 0.0, %v1097
      %v1099 = vpop.f32.mrf.mxu0
      %1100 = vmatprep.mubr.bf16.mxu0 0
      %1101 = vmatmul.mubr.bf16.gmra.mxu0 %v521
      %v1102 = vpop.f32.mrf.mxu0
      %v1103 = vadd.f32 0.0, %v1102
      %v1104 = vpop.f32.mrf.mxu0
      %v1105 = vpop.f32.mrf.mxu0
      %v1106 = vadd.f32 0.0, %v1105
      %v1107 = vpop.f32.mrf.mxu0
      %1108 = vmatprep.mubr.bf16.mxu0 0
      %1109 = vmatmul.mubr.bf16.gmra.mxu0 %v524
      %v1110 = vpop.f32.mrf.mxu0
      %v1111 = vadd.f32 0.0, %v1110
      %v1112 = vpop.f32.mrf.mxu0
      %v1113 = vpop.f32.mrf.mxu0
      %v1114 = vadd.f32 0.0, %v1113
      %v1115 = vpop.f32.mrf.mxu0
      %1116 = vmatprep.mubr.bf16.mxu0 0
      %1117 = vmatmul.mubr.bf16.gmra.mxu0 %v527
      %v1118 = vpop.f32.mrf.mxu0
      %v1119 = vadd.f32 0.0, %v1118
      %v1120 = vpop.f32.mrf.mxu0
      %v1121 = vpop.f32.mrf.mxu0
      %v1122 = vadd.f32 0.0, %v1121
      %v1123 = vpop.f32.mrf.mxu0
      %1124 = vmatprep.mubr.bf16.mxu0 0
      %1125 = vmatmul.mubr.bf16.gmra.mxu0 %v530
      %v1126 = vpop.f32.mrf.mxu0
      %v1127 = vadd.f32 0.0, %v1126
      %v1128 = vpop.f32.mrf.mxu0
      %v1129 = vpop.f32.mrf.mxu0
      %v1130 = vadd.f32 0.0, %v1129
      %v1131 = vpop.f32.mrf.mxu0
      %1132 = vdwg.mxu0
      %v1133 = vpack.c.bf16 %v1010, %v1007
      %v1134 = vpack.c.bf16 %v1018, %v1015
      %v1135 = vpack.c.bf16 %v1026, %v1023
      %v1136 = vpack.c.bf16 %v1034, %v1031
      %v1137 = vpack.c.bf16 %v1042, %v1039
      %v1138 = vpack.c.bf16 %v1050, %v1047
      %v1139 = vpack.c.bf16 %v1058, %v1055
      %v1140 = vpack.c.bf16 %v1066, %v1063
      %v1141 = vpack.c.bf16 %v1074, %v1071
      %v1142 = vpack.c.bf16 %v1082, %v1079
      %v1143 = vpack.c.bf16 %v1090, %v1087
      %v1144 = vpack.c.bf16 %v1098, %v1095
      %v1145 = vpack.c.bf16 %v1106, %v1103
      %v1146 = vpack.c.bf16 %v1114, %v1111
      %v1147 = vpack.c.bf16 %v1122, %v1119
      %v1148 = vpack.c.bf16 %v1130, %v1127
      %v1165 = vunpack.c.l.b16 %v1133
      %v1166 = vunpack.c.h.b16 %v1133
      %v1167 = vunpack.c.l.b16 %v1134
      %v1168 = vunpack.c.h.b16 %v1134
      %v1169 = vunpack.c.l.b16 %v1135
      %v1170 = vunpack.c.h.b16 %v1135
      %v1171 = vunpack.c.l.b16 %v1136
      %v1172 = vunpack.c.h.b16 %v1136
      %v1173 = vunpack.c.l.b16 %v1137
      %v1174 = vunpack.c.h.b16 %v1137
      %v1175 = vunpack.c.l.b16 %v1138
      %v1176 = vunpack.c.h.b16 %v1138
      %v1177 = vunpack.c.l.b16 %v1139
      %v1178 = vunpack.c.h.b16 %v1139
      %v1179 = vunpack.c.l.b16 %v1140
      %v1180 = vunpack.c.h.b16 %v1140
      %v1181 = vunpack.c.l.b16 %v1141
      %v1182 = vunpack.c.h.b16 %v1141
      %v1183 = vunpack.c.l.b16 %v1142
      %v1184 = vunpack.c.h.b16 %v1142
      %v1185 = vunpack.c.l.b16 %v1143
      %v1186 = vunpack.c.h.b16 %v1143
      %v1187 = vunpack.c.l.b16 %v1144
      %v1188 = vunpack.c.h.b16 %v1144
      %v1189 = vunpack.c.l.b16 %v1145
      %v1190 = vunpack.c.h.b16 %v1145
      %v1191 = vunpack.c.l.b16 %v1146
      %v1192 = vunpack.c.h.b16 %v1146
      %v1193 = vunpack.c.l.b16 %v1147
      %v1194 = vunpack.c.h.b16 %v1147
      %v1195 = vunpack.c.l.b16 %v1148
      %v1196 = vunpack.c.h.b16 %v1148
      %v1197 = vpack.c.b16 %v1165, %v1165
      %v1198 = vpack.c.b16 %v1166, %v1166
      %v1199 = vpack.c.b16 %v1167, %v1167
      %v1200 = vpack.c.b16 %v1168, %v1168
      %v1201 = vpack.c.b16 %v1169, %v1169
      %v1202 = vpack.c.b16 %v1170, %v1170
      %v1203 = vpack.c.b16 %v1171, %v1171
      %v1204 = vpack.c.b16 %v1172, %v1172
      %v1205 = vpack.c.b16 %v1173, %v1173
      %v1206 = vpack.c.b16 %v1174, %v1174
      %v1207 = vpack.c.b16 %v1175, %v1175
      %v1208 = vpack.c.b16 %v1176, %v1176
      %v1209 = vpack.c.b16 %v1177, %v1177
      %v1210 = vpack.c.b16 %v1178, %v1178
      %v1211 = vpack.c.b16 %v1179, %v1179
      %v1212 = vpack.c.b16 %v1180, %v1180
      %v1213 = vpack.c.b16 %v1181, %v1181
      %v1214 = vpack.c.b16 %v1182, %v1182
      %v1215 = vpack.c.b16 %v1183, %v1183
      %v1216 = vpack.c.b16 %v1184, %v1184
      %v1217 = vpack.c.b16 %v1185, %v1185
      %v1218 = vpack.c.b16 %v1186, %v1186
      %v1219 = vpack.c.b16 %v1187, %v1187
      %v1220 = vpack.c.b16 %v1188, %v1188
      %v1221 = vpack.c.b16 %v1189, %v1189
      %v1222 = vpack.c.b16 %v1190, %v1190
      %v1223 = vpack.c.b16 %v1191, %v1191
      %v1224 = vpack.c.b16 %v1192, %v1192
      %v1225 = vpack.c.b16 %v1193, %v1193
      %v1226 = vpack.c.b16 %v1194, %v1194
      %v1227 = vpack.c.b16 %v1195, %v1195
      %v1228 = vpack.c.b16 %v1196, %v1196
      %vm1261 = vcmask 125952
      %1262 = vst.msk [vmem:[%s321] sm:$0xf] %vm1261, %v1197
      %1263 = vst.msk [vmem:[%s321 + $0x4] sm:$0xf] %vm1261, %v1198
      %1264 = vst.msk [vmem:[%s321 + $0x8] sm:$0xf] %vm1261, %v1199
      %1265 = vst.msk [vmem:[%s321 + $0xc] sm:$0xf] %vm1261, %v1200
      %1266 = vst.msk [vmem:[%s321 + $0x10] sm:$0xf] %vm1261, %v1201
      %1267 = vst.msk [vmem:[%s321 + $0x14] sm:$0xf] %vm1261, %v1202
      %1268 = vst.msk [vmem:[%s321 + $0x18] sm:$0xf] %vm1261, %v1203
      %1269 = vst.msk [vmem:[%s321 + $0x1c] sm:$0xf] %vm1261, %v1204
      %1270 = vst.msk [vmem:[%s321 + $0x20] sm:$0xf] %vm1261, %v1205
      %1271 = vst.msk [vmem:[%s321 + $0x24] sm:$0xf] %vm1261, %v1206
      %1272 = vst.msk [vmem:[%s321 + $0x28] sm:$0xf] %vm1261, %v1207
      %1273 = vst.msk [vmem:[%s321 + $0x2c] sm:$0xf] %vm1261, %v1208
      %1274 = vst.msk [vmem:[%s321 + $0x30] sm:$0xf] %vm1261, %v1209
      %1275 = vst.msk [vmem:[%s321 + $0x34] sm:$0xf] %vm1261, %v1210
      %1276 = vst.msk [vmem:[%s321 + $0x38] sm:$0xf] %vm1261, %v1211
      %1277 = vst.msk [vmem:[%s321 + $0x3c] sm:$0xf] %vm1261, %v1212
      %1278 = vst.msk [vmem:[%s321 + $0x40] sm:$0xf] %vm1261, %v1213
      %1279 = vst.msk [vmem:[%s321 + $0x44] sm:$0xf] %vm1261, %v1214
      %1280 = vst.msk [vmem:[%s321 + $0x48] sm:$0xf] %vm1261, %v1215
      %1281 = vst.msk [vmem:[%s321 + $0x4c] sm:$0xf] %vm1261, %v1216
      %1282 = vst.msk [vmem:[%s321 + $0x50] sm:$0xf] %vm1261, %v1217
      %1283 = vst.msk [vmem:[%s321 + $0x54] sm:$0xf] %vm1261, %v1218
      %1284 = vst.msk [vmem:[%s321 + $0x58] sm:$0xf] %vm1261, %v1219
      %1285 = vst.msk [vmem:[%s321 + $0x5c] sm:$0xf] %vm1261, %v1220
      %1286 = vst.msk [vmem:[%s321 + $0x60] sm:$0xf] %vm1261, %v1221
      %1287 = vst.msk [vmem:[%s321 + $0x64] sm:$0xf] %vm1261, %v1222
      %1288 = vst.msk [vmem:[%s321 + $0x68] sm:$0xf] %vm1261, %v1223
      %1289 = vst.msk [vmem:[%s321 + $0x6c] sm:$0xf] %vm1261, %v1224
      %1290 = vst.msk [vmem:[%s321 + $0x70] sm:$0xf] %vm1261, %v1225
      %1291 = vst.msk [vmem:[%s321 + $0x74] sm:$0xf] %vm1261, %v1226
      %1292 = vst.msk [vmem:[%s321 + $0x78] sm:$0xf] %vm1261, %v1227
      %1293 = vst.msk [vmem:[%s321 + $0x7c] sm:$0xf] %vm1261, %v1228
      %s1294 = smul.u32 32, %s20
      %p1295 = scmp.lt.s32.totalorder %s1294, 63
      %s1296 = scalar_select %p1295, %s1294, 63
      %s1297 = smul.addr %s1296, 4
      %s1298 = scalar_lea.vmem %s7, %s1297
      %s1299 = smul.u32 32, %s20
      %p1300 = scmp.lt.s32.totalorder %s1299, 63
      %s1301 = scalar_select %p1300, %s1299, 63
      %s1302 = smul.addr %s1301, 4
      %s1303 = scalar_lea.vmem %s8, %s1302
      // Predicated region
      $region49: #{preact_bottleneck_forward.2} parent=47 // pred_check
        %p1304 = pneg %p190
      $region50: #{preact_bottleneck_forward.2} parent=47 // pred_check_branch
        %1306 = sbr.rel (%p1304) target = $region52
      $region51: #{preact_bottleneck_forward.2} parent=47 // pred_region
        %s1307 = smul.u32 32, %s20
      $region52: #{preact_bottleneck_forward.2} parent=47 // pred_fallthru
        _
      // Predicated region
      $region53: #{preact_bottleneck_forward.2} parent=47 // pred_check
        %p1308 = pneg %p216
      $region54: #{preact_bottleneck_forward.2} parent=47 // pred_check_branch
        %1310 = sbr.rel (%p1308) target = $region56
      $region55: #{preact_bottleneck_forward.2} parent=47 // pred_region
        %s1311 = smul.u32 32, %s20
      $region56: #{preact_bottleneck_forward.2} parent=47 // pred_fallthru
        _
    $region48: #{preact_bottleneck_forward.2} parent=5 // pred_fallthru
      _
    %p1312 = scmp.le.s32.totalorder 2, %s15
    // Predicated region
    $region57: #{preact_bottleneck_forward.2} parent=5 // pred_check
      %p1313 = pneg %p1312
    $region58: #{preact_bottleneck_forward.2} parent=5 // pred_check_branch
      %1315 = sbr.rel (%p1313) target = $region60
    $region59: #{preact_bottleneck_forward.2} parent=5 // pred_region
      %s1316 = ssub.s32 %s15, 2
      // Predicated region
      $region61: #{preact_bottleneck_forward.2} parent=59 // pred_check
        %p1317 = pneg %p196
      $region62: #{preact_bottleneck_forward.2} parent=59 // pred_check_branch
        %1319 = sbr.rel (%p1317) target = $region64
      $region63: #{preact_bottleneck_forward.2} parent=59 // pred_region
        %s1320 = smul.u32 32, %s21
        %p1321 = scmp.lt.s32.totalorder %s1320, 63
        %s1322 = scalar_select %p1321, %s1320, 63
        %s1323 = smul.addr %s1322, 4
        %s1324 = scalar_lea.vmem %s7, %s1323
      $region64: #{preact_bottleneck_forward.2} parent=59 // pred_fallthru
        _
      // Predicated region
      $region65: #{preact_bottleneck_forward.2} parent=59 // pred_check
        %p1325 = pneg %p222
      $region66: #{preact_bottleneck_forward.2} parent=59 // pred_check_branch
        %1327 = sbr.rel (%p1325) target = $region68
      $region67: #{preact_bottleneck_forward.2} parent=59 // pred_region
        %s1328 = smul.u32 32, %s21
        %p1329 = scmp.lt.s32.totalorder %s1328, 63
        %s1330 = scalar_select %p1329, %s1328, 63
        %s1331 = smul.addr %s1330, 4
        %s1332 = scalar_lea.vmem %s8, %s1331
      $region68: #{preact_bottleneck_forward.2} parent=59 // pred_fallthru
        _
    $region60: #{preact_bottleneck_forward.2} parent=5 // pred_fallthru
      _
  $region6: #{preact_bottleneck_forward.2} parent=0 // loop_footer
    %s19 = sadd.s32 1, %s15
  $region7: #{preact_bottleneck_forward.2} parent=0 // loop_footer_branch
    %14 = sbr.rel target = $region3
  $region8: #{preact_bottleneck_forward.2} parent=0 // loop_exit
    _

// kernel: preact_bottleneck_forward.3
$region0: #{preact_bottleneck_forward.3}
  #allocation0 [shape = 'u32[]', space=smem, size = 0x4, offset = 0x4, fixed_abs, tag = 'smem constant byte address 0x4 - core index']
  #allocation1 [shape = 'u32[144,128]{1,0:T(1,128)}', space=vmem, size = 0x12000, scoped, tag = 'internal scratch']
  #allocation2 [shape = 'f32[18,18,4]{2,1,0:T(8,128)}', space=vmem, size = 0x36000, scoped, tag = 'scratch operand']
  %s0 = inlined_call_operand.vmem [shape: bf16[2,16,16,4], index: 0, kind: input, shape index: {}]
  %s1 = inlined_call_operand.vmem [shape: f32[1,4], index: 1, kind: input, shape index: {}]
  %s2 = inlined_call_operand.vmem [shape: f32[1,4], index: 2, kind: input, shape index: {}]
  %s3 = inlined_call_operand.vmem [shape: bf16[36,4], index: 3, kind: input, shape index: {}]
  %s4 = inlined_call_operand.vmem [shape: bf16[4,16], index: 4, kind: input, shape index: {}]
  %s5 = inlined_call_operand.vmem [shape: bf16[2,256,16], index: 5, kind: input, shape index: {}]
  %s6 = inlined_call_operand.vmem [shape: f32[2,256,16], index: 6, kind: output, shape index: {}]
  %s7 = sld [smem:[#allocation0]]
  $region61: #{preact_bottleneck_forward.3} parent=0
    _
  %s9 = ssub.s32 1, %s7
  %s10 = scalar_select 0, %s9, %s7
  loop: start=0, step=1, limit=6
  $region2: #{preact_bottleneck_forward.3} parent=0 // loop_pre_header
    _
  $region3: #{preact_bottleneck_forward.3} parent=0 // loop_header
    %s12 = sphi 0, %s16
    %p13 = scmp.ge.s32.totalorder %s12, 6
    %s19 = sphi 0, %s31
    %s20 = sphi 0, %s27
    %s21 = sphi 0, %s19
    %s22 = sphi 0, %s20
    %s23 = sphi 0, %s21
    %s24 = sphi 0, %s22
    %s34 = sphi 0, %s36
    %s37 = sphi 0, %s34
    %s38 = sphi 0, %s37
    %s54 = sphi 0, %s38
    %s58 = sphi 0, %s58
    %s60 = sphi 0, %s58
    %s61 = sphi 0, %s60
    %s75 = sphi 0, %s61
    %s79 = sphi 0, %s79
    %s81 = sphi 0, %s79
    %s82 = sphi 0, %s81
    %s96 = sphi 0, %s82
    %s100 = sphi 0, %s100
    %s102 = sphi 0, %s100
    %s103 = sphi 0, %s102
    %s117 = sphi 0, %s103
    %s121 = sphi 0, %s121
    %s123 = sphi 0, %s121
    %s124 = sphi 0, %s123
    %s138 = sphi 0, %s124
    %s146 = sphi 0, %s148
    %s149 = sphi 0, %s146
    %s150 = sphi 0, %s149
    %s166 = sphi 0, %s150
    %s174 = sphi 0, %s176
    %s177 = sphi 0, %s174
    %s178 = sphi 0, %s177
    %s194 = sphi 0, %s178
  $region4: #{preact_bottleneck_forward.3} parent=0 // loop_header_branch
    %15 = sbr.rel (%p13) target = $region8
  $region5: #{preact_bottleneck_forward.3} parent=0 // loop_body
    %s17 = ssub.s32 %s12, 1
    %s18 = ssub.s32 %s12, 2
    %s25 = sadd.s32 1, %s20
    %p26 = scmp.ge.s32.totalorder %s25, 2
    %s27 = scalar_select %p26, 0, %s25
    %s28 = sadd.s32 1, %s19
    %s29 = scalar_select %p26, %s28, %s19
    %p30 = scmp.ge.s32.totalorder %s29, 2
    %s31 = scalar_select %p30, 0, %s29
    %s32 = ssub.s32 %s19, %s31
    %p33 = scmp.eq.s32.totalorder %s32, 0
    %s35 = sadd.s32 %s34, 1
    %s36 = scalar_select %p33, %s34, %s35
    %p39 = pneg %p33
    %p40 = scmp.eq.s32.totalorder %s12, 3
    %p41 = por %p39, %p40
    %p42 = scmp.ne.s32.totalorder %s34, %s37
    %p43 = scmp.eq.s32.totalorder %s12, 0
    %p44 = por %p42, %p43
    %p45 = scmp.ne.s32.totalorder %s34, %s37
    %p46 = scmp.eq.s32.totalorder %s17, 3
    %p47 = por %p45, %p46
    %p48 = scmp.ne.s32.totalorder %s37, %s38
    %p49 = scmp.eq.s32.totalorder %s17, 0
    %p50 = por %p48, %p49
    %p51 = scmp.ne.s32.totalorder %s37, %s38
    %p52 = scmp.eq.s32.totalorder %s18, 3
    %p53 = por %p51, %p52
    %p55 = scmp.ne.s32.totalorder %s38, %s54
    %p56 = scmp.eq.s32.totalorder %s18, 0
    %p57 = por %p55, %p56
    %s59 = sadd.s32 %s58, 1
    %p62 = scmp.eq.s32.totalorder %s12, 3
    %p63 = scmp.ne.s32.totalorder %s58, %s60
    %p64 = scmp.eq.s32.totalorder %s12, 0
    %p65 = por %p63, %p64
    %p66 = scmp.ne.s32.totalorder %s58, %s60
    %p67 = scmp.eq.s32.totalorder %s17, 3
    %p68 = por %p66, %p67
    %p69 = scmp.ne.s32.totalorder %s60, %s61
    %p70 = scmp.eq.s32.totalorder %s17, 0
    %p71 = por %p69, %p70
    %p72 = scmp.ne.s32.totalorder %s60, %s61
    %p73 = scmp.eq.s32.totalorder %s18, 3
    %p74 = por %p72, %p73
    %p76 = scmp.ne.s32.totalorder %s61, %s75
    %p77 = scmp.eq.s32.totalorder %s18, 0
    %p78 = por %p76, %p77
    %s80 = sadd.s32 %s79, 1
    %p83 = scmp.eq.s32.totalorder %s12, 3
    %p84 = scmp.ne.s32.totalorder %s79, %s81
    %p85 = scmp.eq.s32.totalorder %s12, 0
    %p86 = por %p84, %p85
    %p87 = scmp.ne.s32.totalorder %s79, %s81
    %p88 = scmp.eq.s32.totalorder %s17, 3
    %p89 = por %p87, %p88
    %p90 = scmp.ne.s32.totalorder %s81, %s82
    %p91 = scmp.eq.s32.totalorder %s17, 0
    %p92 = por %p90, %p91
    %p93 = scmp.ne.s32.totalorder %s81, %s82
    %p94 = scmp.eq.s32.totalorder %s18, 3
    %p95 = por %p93, %p94
    %p97 = scmp.ne.s32.totalorder %s82, %s96
    %p98 = scmp.eq.s32.totalorder %s18, 0
    %p99 = por %p97, %p98
    %s101 = sadd.s32 %s100, 1
    %p104 = scmp.eq.s32.totalorder %s12, 3
    %p105 = scmp.ne.s32.totalorder %s100, %s102
    %p106 = scmp.eq.s32.totalorder %s12, 0
    %p107 = por %p105, %p106
    %p108 = scmp.ne.s32.totalorder %s100, %s102
    %p109 = scmp.eq.s32.totalorder %s17, 3
    %p110 = por %p108, %p109
    %p111 = scmp.ne.s32.totalorder %s102, %s103
    %p112 = scmp.eq.s32.totalorder %s17, 0
    %p113 = por %p111, %p112
    %p114 = scmp.ne.s32.totalorder %s102, %s103
    %p115 = scmp.eq.s32.totalorder %s18, 3
    %p116 = por %p114, %p115
    %p118 = scmp.ne.s32.totalorder %s103, %s117
    %p119 = scmp.eq.s32.totalorder %s18, 0
    %p120 = por %p118, %p119
    %s122 = sadd.s32 %s121, 1
    %p125 = scmp.eq.s32.totalorder %s12, 3
    %p126 = scmp.ne.s32.totalorder %s121, %s123
    %p127 = scmp.eq.s32.totalorder %s12, 0
    %p128 = por %p126, %p127
    %p129 = scmp.ne.s32.totalorder %s121, %s123
    %p130 = scmp.eq.s32.totalorder %s17, 3
    %p131 = por %p129, %p130
    %p132 = scmp.ne.s32.totalorder %s123, %s124
    %p133 = scmp.eq.s32.totalorder %s17, 0
    %p134 = por %p132, %p133
    %p135 = scmp.ne.s32.totalorder %s123, %s124
    %p136 = scmp.eq.s32.totalorder %s18, 3
    %p137 = por %p135, %p136
    %p139 = scmp.ne.s32.totalorder %s124, %s138
    %p140 = scmp.eq.s32.totalorder %s18, 0
    %p141 = por %p139, %p140
    %s142 = ssub.s32 %s19, %s31
    %s143 = ssub.s32 %s20, %s27
    %s144 = sor.u32 %s142, %s143
    %p145 = scmp.eq.s32.totalorder %s144, 0
    %s147 = sadd.s32 %s146, 1
    %s148 = scalar_select %p145, %s146, %s147
    %p151 = pneg %p145
    %p152 = scmp.eq.s32.totalorder %s12, 3
    %p153 = por %p151, %p152
    %p154 = scmp.ne.s32.totalorder %s146, %s149
    %p155 = scmp.eq.s32.totalorder %s12, 0
    %p156 = por %p154, %p155
    %p157 = scmp.ne.s32.totalorder %s146, %s149
    %p158 = scmp.eq.s32.totalorder %s17, 3
    %p159 = por %p157, %p158
    %p160 = scmp.ne.s32.totalorder %s149, %s150
    %p161 = scmp.eq.s32.totalorder %s17, 0
    %p162 = por %p160, %p161
    %p163 = scmp.ne.s32.totalorder %s149, %s150
    %p164 = scmp.eq.s32.totalorder %s18, 3
    %p165 = por %p163, %p164
    %p167 = scmp.ne.s32.totalorder %s150, %s166
    %p168 = scmp.eq.s32.totalorder %s18, 0
    %p169 = por %p167, %p168
    %s170 = ssub.s32 %s19, %s31
    %s171 = ssub.s32 %s20, %s27
    %s172 = sor.u32 %s170, %s171
    %p173 = scmp.eq.s32.totalorder %s172, 0
    %s175 = sadd.s32 %s174, 1
    %s176 = scalar_select %p173, %s174, %s175
    %p179 = pneg %p173
    %p180 = scmp.eq.s32.totalorder %s12, 3
    %p181 = por %p179, %p180
    %p182 = scmp.ne.s32.totalorder %s174, %s177
    %p183 = scmp.eq.s32.totalorder %s12, 0
    %p184 = por %p182, %p183
    %p185 = scmp.ne.s32.totalorder %s174, %s177
    %p186 = scmp.eq.s32.totalorder %s17, 3
    %p187 = por %p185, %p186
    %p188 = scmp.ne.s32.totalorder %s177, %s178
    %p189 = scmp.eq.s32.totalorder %s17, 0
    %p190 = por %p188, %p189
    %p191 = scmp.ne.s32.totalorder %s177, %s178
    %p192 = scmp.eq.s32.totalorder %s18, 3
    %p193 = por %p191, %p192
    %p195 = scmp.ne.s32.totalorder %s178, %s194
    %p196 = scmp.eq.s32.totalorder %s18, 0
    %p197 = por %p195, %p196
    %p198 = scmp.le.s32.totalorder 1, %s12
    %p199 = scmp.lt.s32.totalorder %s12, 5
    %p200 = pnand %p198, %p199
    %p201 = pneg %p200
    // Predicated region
    $region9: #{preact_bottleneck_forward.3} parent=5 // pred_check
      _
    $region10: #{preact_bottleneck_forward.3} parent=5 // pred_check_branch
      %203 = sbr.rel (%p200) target = $region12
    $region11: #{preact_bottleneck_forward.3} parent=5 // pred_region
      %s204 = ssub.s32 %s12, 1
      // Predicated region
      $region13: #{preact_bottleneck_forward.3} parent=11 // pred_check
        %p205 = pneg %p71
      $region14: #{preact_bottleneck_forward.3} parent=11 // pred_check_branch
        %207 = sbr.rel (%p205) target = $region16
      $region15: #{preact_bottleneck_forward.3} parent=11 // pred_region
        _
      $region16: #{preact_bottleneck_forward.3} parent=11 // pred_fallthru
        _
      // Predicated region
      $region17: #{preact_bottleneck_forward.3} parent=11 // pred_check
        %p208 = pneg %p92
      $region18: #{preact_bottleneck_forward.3} parent=11 // pred_check_branch
        %210 = sbr.rel (%p208) target = $region20
      $region19: #{preact_bottleneck_forward.3} parent=11 // pred_region
        _
      $region20: #{preact_bottleneck_forward.3} parent=11 // pred_fallthru
        _
      // Predicated region
      $region21: #{preact_bottleneck_forward.3} parent=11 // pred_check
        %p211 = pneg %p113
      $region22: #{preact_bottleneck_forward.3} parent=11 // pred_check_branch
        %213 = sbr.rel (%p211) target = $region24
      $region23: #{preact_bottleneck_forward.3} parent=11 // pred_region
        _
      $region24: #{preact_bottleneck_forward.3} parent=11 // pred_fallthru
        _
      // Predicated region
      $region25: #{preact_bottleneck_forward.3} parent=11 // pred_check
        %p214 = pneg %p134
      $region26: #{preact_bottleneck_forward.3} parent=11 // pred_check_branch
        %216 = sbr.rel (%p214) target = $region28
      $region27: #{preact_bottleneck_forward.3} parent=11 // pred_region
        _
      $region28: #{preact_bottleneck_forward.3} parent=11 // pred_fallthru
        _
    $region12: #{preact_bottleneck_forward.3} parent=5 // pred_fallthru
      _
    %p217 = scmp.lt.s32.totalorder %s12, 4
    // Predicated region
    $region29: #{preact_bottleneck_forward.3} parent=5 // pred_check
      %p218 = pneg %p217
    $region30: #{preact_bottleneck_forward.3} parent=5 // pred_check_branch
      %220 = sbr.rel (%p218) target = $region32
    $region31: #{preact_bottleneck_forward.3} parent=5 // pred_region
      // Predicated region
      $region33: #{preact_bottleneck_forward.3} parent=31 // pred_check
        %p221 = pneg %p44
      $region34: #{preact_bottleneck_forward.3} parent=31 // pred_check_branch
        %223 = sbr.rel (%p221) target = $region36
      $region35: #{preact_bottleneck_forward.3} parent=31 // pred_region
        %p224 = scmp.lt.s32.totalorder %s19, 1
        %s225 = scalar_select %p224, %s19, 1
        %s226 = smul.addr %s225, 32
        %s227 = smul.addr %s226, 4
        %s228 = scalar_lea.vmem %s0, %s227
      $region36: #{preact_bottleneck_forward.3} parent=31 // pred_fallthru
        _
      // Predicated region
      $region37: #{preact_bottleneck_forward.3} parent=31 // pred_check
        %p229 = pneg %p156
      $region38: #{preact_bottleneck_forward.3} parent=31 // pred_check_branch
        %231 = sbr.rel (%p229) target = $region40
      $region39: #{preact_bottleneck_forward.3} parent=31 // pred_region
        %s232 = smul.u32 16, %s20
        %p233 = scmp.lt.s32.totalorder %s19, 1
        %s234 = scalar_select %p233, %s19, 1
        %p235 = scmp.lt.s32.totalorder %s232, 31
        %s236 = scalar_select %p235, %s232, 31
        %s237 = smul.addr %s234, 32
        %s238 = sadd.s32 %s236, %s237
        %s239 = smul.addr %s238, 4
        %s240 = scalar_lea.vmem %s5, %s239
        %s241 = smul.u32 16, %s20
      $region40: #{preact_bottleneck_forward.3} parent=31 // pred_fallthru
        _
    $region32: #{preact_bottleneck_forward.3} parent=5 // pred_fallthru
      _
    %p242 = scmp.le.s32.totalorder 1, %s12
    %p243 = scmp.lt.s32.totalorder %s12, 5
    %p244 = pnand %p242, %p243
    %p245 = pneg %p244
    // Predicated region
    $region41: #{preact_bottleneck_forward.3} parent=5 // pred_check
      _
    $region42: #{preact_bottleneck_forward.3} parent=5 // pred_check_branch
      %247 = sbr.rel (%p244) target = $region44
    $region43: #{preact_bottleneck_forward.3} parent=5 // pred_region
      %s248 = ssub.s32 %s12, 1
      %p249 = scmp.lt.s32.totalorder %s21, 1
      %s250 = scalar_select %p249, %s21, 1
      %s251 = smul.addr %s250, 32
      %s252 = smul.addr %s251, 4
      %s253 = scalar_lea.vmem %s0, %s252
      %p254 = pneg %p50
      %p255 = pneg %p47
      %p256 = pneg %p71
      %p257 = pneg %p68
      %p258 = pneg %p92
      %p259 = pneg %p89
      %p260 = pneg %p113
      %p261 = pneg %p110
      %p262 = pneg %p134
      %p263 = pneg %p131
      %s264 = smul.u32 16, %s22
      %p265 = scmp.lt.s32.totalorder %s21, 1
      %s266 = scalar_select %p265, %s21, 1
      %p267 = scmp.lt.s32.totalorder %s264, 31
      %s268 = scalar_select %p267, %s264, 31
      %s269 = smul.addr %s266, 32
      %s270 = sadd.s32 %s268, %s269
      %s271 = smul.addr %s270, 4
      %s272 = scalar_lea.vmem %s5, %s271
      %p273 = pneg %p162
      %p274 = pneg %p159
      %p275 = pneg %p190
      %p276 = pneg %p187
      %s277 = smul.u32 16, %s22
      %p278 = scmp.lt.s32.totalorder %s21, 1
      %s279 = scalar_select %p278, %s21, 1
      %p280 = scmp.lt.s32.totalorder %s277, 31
      %s281 = scalar_select %p280, %s277, 31
      %s282 = smul.addr %s279, 32
      %s283 = sadd.s32 %s281, %s282
      %s284 = smul.addr %s283, 8
      %s285 = scalar_lea.vmem %s6, %s284
      %p286 = scmp.lt.s32.totalorder %s21, 1
      %s287 = scalar_select %p286, %s21, 1
      %s288 = smul.addr %s287, 32
      %s289 = smul.addr %s288, 4
      %s290 = scalar_lea.vmem %s0, %s289
      %s291 = smul.u32 16, %s22
      %p292 = scmp.lt.s32.totalorder %s21, 1
      %s293 = scalar_select %p292, %s21, 1
      %p294 = scmp.lt.s32.totalorder %s291, 31
      %s295 = scalar_select %p294, %s291, 31
      %s296 = smul.addr %s293, 32
      %s297 = sadd.s32 %s295, %s296
      %s298 = smul.addr %s297, 4
      %s299 = scalar_lea.vmem %s5, %s298
      %s300 = smul.u32 16, %s22
      %s301 = smul.u32 16, %s22
      %p302 = scmp.lt.s32.totalorder %s21, 1
      %s303 = scalar_select %p302, %s21, 1
      %p304 = scmp.lt.s32.totalorder %s301, 31
      %s305 = scalar_select %p304, %s301, 31
      %s306 = smul.addr %s303, 32
      %s307 = sadd.s32 %s305, %s306
      %s308 = smul.addr %s307, 8
      %s309 = scalar_lea.vmem %s6, %s308
      %s310 = smul.u32 16, %s22
      %p312 = scmp.eq.s32.totalorder %s22, 0
      // Predicated region
      $region45: #{preact_bottleneck_forward.3} parent=43 // pred_check
        %p313 = pneg %p312
      $region46: #{preact_bottleneck_forward.3} parent=43 // pred_check_branch
        %315 = sbr.rel (%p313) target = $region48
      $region47: #{preact_bottleneck_forward.3} parent=43 // pred_region
        %vm316 = vcmask 31744
        %317 = vst.msk [vmem:[#allocation2] sm:$0xff] %vm316, 0.0
        %318 = vst.msk [vmem:[#allocation2 + $0x8] sm:$0xff] %vm316, 0.0
        %vm319 = vcmask 25600
        %320 = vst.msk [vmem:[#allocation2 + $0x10] sm:$0x3] %vm319, 0.0
        %321 = vst.msk [vmem:[#allocation2 + $0x18] sm:$0xff] %vm316, 0.0
        %322 = vst.msk [vmem:[#allocation2 + $0x20] sm:$0xff] %vm316, 0.0
        %323 = vst.msk [vmem:[#allocation2 + $0x28] sm:$0x3] %vm319, 0.0
        %324 = vst.msk [vmem:[#allocation2 + $0x30] sm:$0xff] %vm316, 0.0
        %325 = vst.msk [vmem:[#allocation2 + $0x38] sm:$0xff] %vm316, 0.0
        %326 = vst.msk [vmem:[#allocation2 + $0x40] sm:$0x3] %vm319, 0.0
        %327 = vst.msk [vmem:[#allocation2 + $0x48] sm:$0xff] %vm316, 0.0
        %328 = vst.msk [vmem:[#allocation2 + $0x50] sm:$0xff] %vm316, 0.0
        %329 = vst.msk [vmem:[#allocation2 + $0x58] sm:$0x3] %vm319, 0.0
        %330 = vst.msk [vmem:[#allocation2 + $0x60] sm:$0xff] %vm316, 0.0
        %331 = vst.msk [vmem:[#allocation2 + $0x68] sm:$0xff] %vm316, 0.0
        %332 = vst.msk [vmem:[#allocation2 + $0x70] sm:$0x3] %vm319, 0.0
        %333 = vst.msk [vmem:[#allocation2 + $0x78] sm:$0xff] %vm316, 0.0
        %334 = vst.msk [vmem:[#allocation2 + $0x80] sm:$0xff] %vm316, 0.0
        %335 = vst.msk [vmem:[#allocation2 + $0x88] sm:$0x3] %vm319, 0.0
        %336 = vst.msk [vmem:[#allocation2 + $0x90] sm:$0xff] %vm316, 0.0
        %337 = vst.msk [vmem:[#allocation2 + $0x98] sm:$0xff] %vm316, 0.0
        %338 = vst.msk [vmem:[#allocation2 + $0xa0] sm:$0x3] %vm319, 0.0
        %339 = vst.msk [vmem:[#allocation2 + $0xa8] sm:$0xff] %vm316, 0.0
        %340 = vst.msk [vmem:[#allocation2 + $0xb0] sm:$0xff] %vm316, 0.0
        %341 = vst.msk [vmem:[#allocation2 + $0xb8] sm:$0x3] %vm319, 0.0
        %342 = vst.msk [vmem:[#allocation2 + $0xc0] sm:$0xff] %vm316, 0.0
        %343 = vst.msk [vmem:[#allocation2 + $0xc8] sm:$0xff] %vm316, 0.0
        %344 = vst.msk [vmem:[#allocation2 + $0xd0] sm:$0x3] %vm319, 0.0
        %345 = vst.msk [vmem:[#allocation2 + $0xd8] sm:$0xff] %vm316, 0.0
        %346 = vst.msk [vmem:[#allocation2 + $0xe0] sm:$0xff] %vm316, 0.0
        %347 = vst.msk [vmem:[#allocation2 + $0xe8] sm:$0x3] %vm319, 0.0
        %348 = vst.msk [vmem:[#allocation2 + $0xf0] sm:$0xff] %vm316, 0.0
        %349 = vst.msk [vmem:[#allocation2 + $0xf8] sm:$0xff] %vm316, 0.0
        %350 = vst.msk [vmem:[#allocation2 + $0x100] sm:$0x3] %vm319, 0.0
        %351 = vst.msk [vmem:[#allocation2 + $0x108] sm:$0xff] %vm316, 0.0
        %352 = vst.msk [vmem:[#allocation2 + $0x110] sm:$0xff] %vm316, 0.0
        %353 = vst.msk [vmem:[#allocation2 + $0x118] sm:$0x3] %vm319, 0.0
        %354 = vst.msk [vmem:[#allocation2 + $0x120] sm:$0xff] %vm316, 0.0
        %355 = vst.msk [vmem:[#allocation2 + $0x128] sm:$0xff] %vm316, 0.0
        %356 = vst.msk [vmem:[#allocation2 + $0x130] sm:$0x3] %vm319, 0.0
        %357 = vst.msk [vmem:[#allocation2 + $0x138] sm:$0xff] %vm316, 0.0
        %358 = vst.msk [vmem:[#allocation2 + $0x140] sm:$0xff] %vm316, 0.0
        %359 = vst.msk [vmem:[#allocation2 + $0x148] sm:$0x3] %vm319, 0.0
        %360 = vst.msk [vmem:[#allocation2 + $0x150] sm:$0xff] %vm316, 0.0
        %361 = vst.msk [vmem:[#allocation2 + $0x158] sm:$0xff] %vm316, 0.0
        %362 = vst.msk [vmem:[#allocation2 + $0x160] sm:$0x3] %vm319, 0.0
        %363 = vst.msk [vmem:[#allocation2 + $0x168] sm:$0xff] %vm316, 0.0
        %364 = vst.msk [vmem:[#allocation2 + $0x170] sm:$0xff] %vm316, 0.0
        %365 = vst.msk [vmem:[#allocation2 + $0x178] sm:$0x3] %vm319, 0.0
        %366 = vst.msk [vmem:[#allocation2 + $0x180] sm:$0xff] %vm316, 0.0
        %367 = vst.msk [vmem:[#allocation2 + $0x188] sm:$0xff] %vm316, 0.0
        %368 = vst.msk [vmem:[#allocation2 + $0x190] sm:$0x3] %vm319, 0.0
        %369 = vst.msk [vmem:[#allocation2 + $0x198] sm:$0xff] %vm316, 0.0
        %370 = vst.msk [vmem:[#allocation2 + $0x1a0] sm:$0xff] %vm316, 0.0
        %371 = vst.msk [vmem:[#allocation2 + $0x1a8] sm:$0x3] %vm319, 0.0
        %v372 = vld [vmem:[%s290] sm:$0xf]
        %v373 = vld [vmem:[%s290 + $0x4] sm:$0xf]
        %v374 = vld [vmem:[%s290 + $0x8] sm:$0xf]
        %v375 = vld [vmem:[%s290 + $0xc] sm:$0xf]
        %v376 = vld [vmem:[%s290 + $0x10] sm:$0xf]
        %v377 = vld [vmem:[%s290 + $0x14] sm:$0xf]
        %v378 = vld [vmem:[%s290 + $0x18] sm:$0xf]
        %v379 = vld [vmem:[%s290 + $0x1c] sm:$0xf]
        %v380 = vld [vmem:[%s290 + $0x20] sm:$0xf]
        %v381 = vld [vmem:[%s290 + $0x24] sm:$0xf]
        %v382 = vld [vmem:[%s290 + $0x28] sm:$0xf]
        %v383 = vld [vmem:[%s290 + $0x2c] sm:$0xf]
        %v384 = vld [vmem:[%s290 + $0x30] sm:$0xf]
        %v385 = vld [vmem:[%s290 + $0x34] sm:$0xf]
        %v386 = vld [vmem:[%s290 + $0x38] sm:$0xf]
        %v387 = vld [vmem:[%s290 + $0x3c] sm:$0xf]
        %v388 = vld [vmem:[%s290 + $0x40] sm:$0xf]
        %v389 = vld [vmem:[%s290 + $0x44] sm:$0xf]
        %v390 = vld [vmem:[%s290 + $0x48] sm:$0xf]
        %v391 = vld [vmem:[%s290 + $0x4c] sm:$0xf]
        %v392 = vld [vmem:[%s290 + $0x50] sm:$0xf]
        %v393 = vld [vmem:[%s290 + $0x54] sm:$0xf]
        %v394 = vld [vmem:[%s290 + $0x58] sm:$0xf]
        %v395 = vld [vmem:[%s290 + $0x5c] sm:$0xf]
        %v396 = vld [vmem:[%s290 + $0x60] sm:$0xf]
        %v397 = vld [vmem:[%s290 + $0x64] sm:$0xf]
        %v398 = vld [vmem:[%s290 + $0x68] sm:$0xf]
        %v399 = vld [vmem:[%s290 + $0x6c] sm:$0xf]
        %v400 = vld [vmem:[%s290 + $0x70] sm:$0xf]
        %v401 = vld [vmem:[%s290 + $0x74] sm:$0xf]
        %v402 = vld [vmem:[%s290 + $0x78] sm:$0xf]
        %v403 = vld [vmem:[%s290 + $0x7c] sm:$0xf]
        %v404 = vunpack.c.l.bf16 %v372
        %v405 = vunpack.c.l.bf16 %v373
        %v406 = vunpack.c.l.bf16 %v374
        %v407 = vunpack.c.l.bf16 %v375
        %v408 = vunpack.c.l.bf16 %v376
        %v409 = vunpack.c.l.bf16 %v377
        %v410 = vunpack.c.l.bf16 %v378
        %v411 = vunpack.c.l.bf16 %v379
        %v412 = vunpack.c.l.bf16 %v380
        %v413 = vunpack.c.l.bf16 %v381
        %v414 = vunpack.c.l.bf16 %v382
        %v415 = vunpack.c.l.bf16 %v383
        %v416 = vunpack.c.l.bf16 %v384
        %v417 = vunpack.c.l.bf16 %v385
        %v418 = vunpack.c.l.bf16 %v386
        %v419 = vunpack.c.l.bf16 %v387
        %v420 = vunpack.c.l.bf16 %v388
        %v421 = vunpack.c.l.bf16 %v389
        %v422 = vunpack.c.l.bf16 %v390
        %v423 = vunpack.c.l.bf16 %v391
        %v424 = vunpack.c.l.bf16 %v392
        %v425 = vunpack.c.l.bf16 %v393
        %v426 = vunpack.c.l.bf16 %v394
        %v427 = vunpack.c.l.bf16 %v395
        %v428 = vunpack.c.l.bf16 %v396
        %v429 = vunpack.c.l.bf16 %v397
        %v430 = vunpack.c.l.bf16 %v398
        %v431 = vunpack.c.l.bf16 %v399
        %v432 = vunpack.c.l.bf16 %v400
        %v433 = vunpack.c.l.bf16 %v401
        %v434 = vunpack.c.l.bf16 %v402
        %v435 = vunpack.c.l.bf16 %v403
        %s436 = scalar_lea.vmem [#allocation2], 24
        %437 = vst.msk [vmem:[%s436 + $0x1] sm:$0xff] %vm316, %v404
        %438 = vst.msk [vmem:[%s436 + $0x9] sm:$0xff] %vm316, %v405
        %439 = vst.msk [vmem:[%s436 + $0x19] sm:$0xff] %vm316, %v406
        %440 = vst.msk [vmem:[%s436 + $0x21] sm:$0xff] %vm316, %v407
        %441 = vst.msk [vmem:[%s436 + $0x31] sm:$0xff] %vm316, %v408
        %442 = vst.msk [vmem:[%s436 + $0x39] sm:$0xff] %vm316, %v409
        %443 = vst.msk [vmem:[%s436 + $0x49] sm:$0xff] %vm316, %v410
        %444 = vst.msk [vmem:[%s436 + $0x51] sm:$0xff] %vm316, %v411
        %445 = vst.msk [vmem:[%s436 + $0x61] sm:$0xff] %vm316, %v412
        %446 = vst.msk [vmem:[%s436 + $0x69] sm:$0xff] %vm316, %v413
        %447 = vst.msk [vmem:[%s436 + $0x79] sm:$0xff] %vm316, %v414
        %448 = vst.msk [vmem:[%s436 + $0x81] sm:$0xff] %vm316, %v415
        %449 = vst.msk [vmem:[%s436 + $0x91] sm:$0xff] %vm316, %v416
        %450 = vst.msk [vmem:[%s436 + $0x99] sm:$0xff] %vm316, %v417
        %451 = vst.msk [vmem:[%s436 + $0xa9] sm:$0xff] %vm316, %v418
        %452 = vst.msk [vmem:[%s436 + $0xb1] sm:$0xff] %vm316, %v419
        %453 = vst.msk [vmem:[%s436 + $0xc1] sm:$0xff] %vm316, %v420
        %454 = vst.msk [vmem:[%s436 + $0xc9] sm:$0xff] %vm316, %v421
        %455 = vst.msk [vmem:[%s436 + $0xd9] sm:$0xff] %vm316, %v422
        %456 = vst.msk [vmem:[%s436 + $0xe1] sm:$0xff] %vm316, %v423
        %457 = vst.msk [vmem:[%s436 + $0xf1] sm:$0xff] %vm316, %v424
        %458 = vst.msk [vmem:[%s436 + $0xf9] sm:$0xff] %vm316, %v425
        %459 = vst.msk [vmem:[%s436 + $0x109] sm:$0xff] %vm316, %v426
        %460 = vst.msk [vmem:[%s436 + $0x111] sm:$0xff] %vm316, %v427
        %461 = vst.msk [vmem:[%s436 + $0x121] sm:$0xff] %vm316, %v428
        %462 = vst.msk [vmem:[%s436 + $0x129] sm:$0xff] %vm316, %v429
        %463 = vst.msk [vmem:[%s436 + $0x139] sm:$0xff] %vm316, %v430
        %464 = vst.msk [vmem:[%s436 + $0x141] sm:$0xff] %vm316, %v431
        %465 = vst.msk [vmem:[%s436 + $0x151] sm:$0xff] %vm316, %v432
        %466 = vst.msk [vmem:[%s436 + $0x159] sm:$0xff] %vm316, %v433
        %467 = vst.msk [vmem:[%s436 + $0x169] sm:$0xff] %vm316, %v434
        %468 = vst.msk [vmem:[%s436 + $0x171] sm:$0xff] %vm316, %v435
      $region48: #{preact_bottleneck_forward.3} parent=43 // pred_fallthru
        _
      %s469 = smul.u32 %s22, 8
      %s470 = smul.u32 %s469, 24
      %s471 = scalar_lea.vmem [#allocation2], %s470
      %v472 = vld [vmem:[%s471] sm:$0xff]
      %v473 = vld [vmem:[%s471 + $0x8] sm:$0xff]
      %v474 = vld [vmem:[%s471 + $0x10] sm:$0x3]
      %v475 = vld [vmem:[%s471 + $0x18] sm:$0xff]
      %v476 = vld [vmem:[%s471 + $0x20] sm:$0xff]
      %v477 = vld [vmem:[%s471 + $0x28] sm:$0x3]
      %v478 = vld [vmem:[%s471 + $0x30] sm:$0xff]
      %v479 = vld [vmem:[%s471 + $0x38] sm:$0xff]
      %v480 = vld [vmem:[%s471 + $0x40] sm:$0x3]
      %v481 = vld [vmem:[%s471 + $0x48] sm:$0xff]
      %v482 = vld [vmem:[%s471 + $0x50] sm:$0xff]
      %v483 = vld [vmem:[%s471 + $0x58] sm:$0x3]
      %v484 = vld [vmem:[%s471 + $0x60] sm:$0xff]
      %v485 = vld [vmem:[%s471 + $0x68] sm:$0xff]
      %v486 = vld [vmem:[%s471 + $0x70] sm:$0x3]
      %v487 = vld [vmem:[%s471 + $0x78] sm:$0xff]
      %v488 = vld [vmem:[%s471 + $0x80] sm:$0xff]
      %v489 = vld [vmem:[%s471 + $0x88] sm:$0x3]
      %v490 = vld [vmem:[%s471 + $0x90] sm:$0xff]
      %v491 = vld [vmem:[%s471 + $0x98] sm:$0xff]
      %v492 = vld [vmem:[%s471 + $0xa0] sm:$0x3]
      %v493 = vld [vmem:[%s471 + $0xa8] sm:$0xff]
      %v494 = vld [vmem:[%s471 + $0xb0] sm:$0xff]
      %v495 = vld [vmem:[%s471 + $0xb8] sm:$0x3]
      %v496 = vld [vmem:[%s471 + $0xc0] sm:$0xff]
      %v497 = vld [vmem:[%s471 + $0xc8] sm:$0xff]
      %v498 = vld [vmem:[%s471 + $0xd0] sm:$0x3]
      %v499 = vld [vmem:[%s471 + $0xd8] sm:$0xff]
      %v500 = vld [vmem:[%s471 + $0xe0] sm:$0xff]
      %v501 = vld [vmem:[%s471 + $0xe8] sm:$0x3]
      %v502 = vpack.c.bf16 %v473, %v472
      %v503 = vpack.c.bf16 %v476, %v475
      %v504 = vpack.c.bf16 %v479, %v478
      %v505 = vpack.c.bf16 %v482, %v481
      %v506 = vpack.c.bf16 %v485, %v484
      %v507 = vpack.c.bf16 %v488, %v487
      %v508 = vpack.c.bf16 %v491, %v490
      %v509 = vpack.c.bf16 %v494, %v493
      %v510 = vpack.c.bf16 %v474, %v474
      %v511 = vpack.c.bf16 %v477, %v477
      %v512 = vpack.c.bf16 %v480, %v480
      %v513 = vpack.c.bf16 %v483, %v483
      %v514 = vpack.c.bf16 %v486, %v486
      %v515 = vpack.c.bf16 %v489, %v489
      %v516 = vpack.c.bf16 %v492, %v492
      %v517 = vpack.c.bf16 %v495, %v495
      %v518 = vpack.c.bf16 %v497, %v496
      %v519 = vpack.c.bf16 %v498, %v498
      %v520 = vpack.c.bf16 %v500, %v499
      %v521 = vpack.c.bf16 %v501, %v501
      %vm522 = vsmask.f32 7424
      %v524 = vshrl.u32 %v502, 16
      %v526 = vshll.u32 %v502, 16
      %v528 = vrot.slane %v526, 1
      %v529 = vor.u32 %v524, %v528
      %v531 = vshll.u32 %v510, 16
      %v533 = vrot.slane %v531, 1
      %v534 = vsel %vm522, %v529, %v533
      %v536 = vshrl.u32 %v503, 16
      %v538 = vshll.u32 %v503, 16
      %v540 = vrot.slane %v538, 1
      %v541 = vor.u32 %v536, %v540
      %v543 = vshll.u32 %v511, 16
      %v545 = vrot.slane %v543, 1
      %v546 = vsel %vm522, %v541, %v545
      %v548 = vshrl.u32 %v504, 16
      %v550 = vshll.u32 %v504, 16
      %v552 = vrot.slane %v550, 1
      %v553 = vor.u32 %v548, %v552
      %v555 = vshll.u32 %v512, 16
      %v557 = vrot.slane %v555, 1
      %v558 = vsel %vm522, %v553, %v557
      %v560 = vshrl.u32 %v505, 16
      %v562 = vshll.u32 %v505, 16
      %v564 = vrot.slane %v562, 1
      %v565 = vor.u32 %v560, %v564
      %v567 = vshll.u32 %v513, 16
      %v569 = vrot.slane %v567, 1
      %v570 = vsel %vm522, %v565, %v569
      %v572 = vshrl.u32 %v506, 16
      %v574 = vshll.u32 %v506, 16
      %v576 = vrot.slane %v574, 1
      %v577 = vor.u32 %v572, %v576
      %v579 = vshll.u32 %v514, 16
      %v581 = vrot.slane %v579, 1
      %v582 = vsel %vm522, %v577, %v581
      %v584 = vshrl.u32 %v507, 16
      %v586 = vshll.u32 %v507, 16
      %v588 = vrot.slane %v586, 1
      %v589 = vor.u32 %v584, %v588
      %v591 = vshll.u32 %v515, 16
      %v593 = vrot.slane %v591, 1
      %v594 = vsel %vm522, %v589, %v593
      %v596 = vshrl.u32 %v508, 16
      %v598 = vshll.u32 %v508, 16
      %v600 = vrot.slane %v598, 1
      %v601 = vor.u32 %v596, %v600
      %v603 = vshll.u32 %v516, 16
      %v605 = vrot.slane %v603, 1
      %v606 = vsel %vm522, %v601, %v605
      %v608 = vshrl.u32 %v509, 16
      %v610 = vshll.u32 %v509, 16
      %v612 = vrot.slane %v610, 1
      %v613 = vor.u32 %v608, %v612
      %v615 = vshll.u32 %v517, 16
      %v617 = vrot.slane %v615, 1
      %v618 = vsel %vm522, %v613, %v617
      %619 = vrot.lane.b32.xlu0 %v534, 4
      %v620 = vpop.permute.xlu0 %619
      %621 = vrot.lane.b32.xlu0 %v546, 4
      %v622 = vpop.permute.xlu0 %621
      %623 = vrot.lane.b32.xlu0 %v558, 4
      %v624 = vpop.permute.xlu0 %623
      %625 = vrot.lane.b32.xlu0 %v570, 4
      %v626 = vpop.permute.xlu0 %625
      %627 = vrot.lane.b32.xlu0 %v582, 4
      %v628 = vpop.permute.xlu0 %627
      %629 = vrot.lane.b32.xlu0 %v594, 4
      %v630 = vpop.permute.xlu0 %629
      %631 = vrot.lane.b32.xlu0 %v606, 4
      %v632 = vpop.permute.xlu0 %631
      %633 = vrot.lane.b32.xlu0 %v618, 4
      %v634 = vpop.permute.xlu0 %633
      %vm651 = vcmask 1046528
      %v652 = vrot.slane %v502, 1
      %v653 = vrot.slane %v510, 1
      %v654 = vsel %vm651, %v652, %v653
      %v655 = vrot.slane %v503, 1
      %v656 = vrot.slane %v511, 1
      %v657 = vsel %vm651, %v655, %v656
      %v658 = vrot.slane %v504, 1
      %v659 = vrot.slane %v512, 1
      %v660 = vsel %vm651, %v658, %v659
      %v661 = vrot.slane %v505, 1
      %v662 = vrot.slane %v513, 1
      %v663 = vsel %vm651, %v661, %v662
      %v664 = vrot.slane %v506, 1
      %v665 = vrot.slane %v514, 1
      %v666 = vsel %vm651, %v664, %v665
      %v667 = vrot.slane %v507, 1
      %v668 = vrot.slane %v515, 1
      %v669 = vsel %vm651, %v667, %v668
      %v670 = vrot.slane %v508, 1
      %v671 = vrot.slane %v516, 1
      %v672 = vsel %vm651, %v670, %v671
      %v673 = vrot.slane %v509, 1
      %v674 = vrot.slane %v517, 1
      %v675 = vsel %vm651, %v673, %v674
      %676 = vrot.lane.b32.xlu0 %v654, 8
      %v677 = vpop.permute.xlu0 %676
      %678 = vrot.lane.b32.xlu0 %v657, 8
      %v679 = vpop.permute.xlu0 %678
      %680 = vrot.lane.b32.xlu0 %v660, 8
      %v681 = vpop.permute.xlu0 %680
      %682 = vrot.lane.b32.xlu0 %v663, 8
      %v683 = vpop.permute.xlu0 %682
      %684 = vrot.lane.b32.xlu0 %v666, 8
      %v685 = vpop.permute.xlu0 %684
      %686 = vrot.lane.b32.xlu0 %v669, 8
      %v687 = vpop.permute.xlu0 %686
      %688 = vrot.lane.b32.xlu0 %v672, 8
      %v689 = vpop.permute.xlu0 %688
      %690 = vrot.lane.b32.xlu0 %v675, 8
      %v691 = vpop.permute.xlu0 %690
      %693 = vrot.lane.b32.xlu0 %v503, 12
      %v694 = vpop.permute.xlu0 %693
      %695 = vrot.lane.b32.xlu0 %v504, 12
      %v696 = vpop.permute.xlu0 %695
      %697 = vrot.lane.b32.xlu0 %v505, 12
      %v698 = vpop.permute.xlu0 %697
      %699 = vrot.lane.b32.xlu0 %v506, 12
      %v700 = vpop.permute.xlu0 %699
      %701 = vrot.lane.b32.xlu0 %v507, 12
      %v702 = vpop.permute.xlu0 %701
      %703 = vrot.lane.b32.xlu0 %v508, 12
      %v704 = vpop.permute.xlu0 %703
      %705 = vrot.lane.b32.xlu0 %v509, 12
      %v706 = vpop.permute.xlu0 %705
      %707 = vrot.lane.b32.xlu0 %v518, 12
      %v708 = vpop.permute.xlu0 %707
      %v710 = vshrl.u32 %v518, 16
      %v712 = vshll.u32 %v518, 16
      %v714 = vrot.slane %v712, 1
      %v715 = vor.u32 %v710, %v714
      %v717 = vshll.u32 %v519, 16
      %v719 = vrot.slane %v717, 1
      %v720 = vsel %vm522, %v715, %v719
      %721 = vrot.lane.b32.xlu0 %v546, 16
      %v722 = vpop.permute.xlu0 %721
      %723 = vrot.lane.b32.xlu0 %v558, 16
      %v724 = vpop.permute.xlu0 %723
      %725 = vrot.lane.b32.xlu0 %v570, 16
      %v726 = vpop.permute.xlu0 %725
      %727 = vrot.lane.b32.xlu0 %v582, 16
      %v728 = vpop.permute.xlu0 %727
      %729 = vrot.lane.b32.xlu0 %v594, 16
      %v730 = vpop.permute.xlu0 %729
      %731 = vrot.lane.b32.xlu0 %v606, 16
      %v732 = vpop.permute.xlu0 %731
      %733 = vrot.lane.b32.xlu0 %v618, 16
      %v734 = vpop.permute.xlu0 %733
      %735 = vrot.lane.b32.xlu0 %v720, 16
      %v736 = vpop.permute.xlu0 %735
      %v738 = vrot.slane %v518, 1
      %v739 = vrot.slane %v519, 1
      %v740 = vsel %vm651, %v738, %v739
      %741 = vrot.lane.b32.xlu0 %v657, 20
      %v742 = vpop.permute.xlu0 %741
      %743 = vrot.lane.b32.xlu0 %v660, 20
      %v744 = vpop.permute.xlu0 %743
      %745 = vrot.lane.b32.xlu0 %v663, 20
      %v746 = vpop.permute.xlu0 %745
      %747 = vrot.lane.b32.xlu0 %v666, 20
      %v748 = vpop.permute.xlu0 %747
      %749 = vrot.lane.b32.xlu0 %v669, 20
      %v750 = vpop.permute.xlu0 %749
      %751 = vrot.lane.b32.xlu0 %v672, 20
      %v752 = vpop.permute.xlu0 %751
      %753 = vrot.lane.b32.xlu0 %v675, 20
      %v754 = vpop.permute.xlu0 %753
      %755 = vrot.lane.b32.xlu0 %v740, 20
      %v756 = vpop.permute.xlu0 %755
      %758 = vrot.lane.b32.xlu0 %v504, 24
      %v759 = vpop.permute.xlu0 %758
      %760 = vrot.lane.b32.xlu0 %v505, 24
      %v761 = vpop.permute.xlu0 %760
      %762 = vrot.lane.b32.xlu0 %v506, 24
      %v763 = vpop.permute.xlu0 %762
      %764 = vrot.lane.b32.xlu0 %v507, 24
      %v765 = vpop.permute.xlu0 %764
      %766 = vrot.lane.b32.xlu0 %v508, 24
      %v767 = vpop.permute.xlu0 %766
      %768 = vrot.lane.b32.xlu0 %v509, 24
      %v769 = vpop.permute.xlu0 %768
      %770 = vrot.lane.b32.xlu0 %v518, 24
      %v771 = vpop.permute.xlu0 %770
      %772 = vrot.lane.b32.xlu0 %v520, 24
      %v773 = vpop.permute.xlu0 %772
      %v775 = vshrl.u32 %v520, 16
      %v777 = vshll.u32 %v520, 16
      %v779 = vrot.slane %v777, 1
      %v780 = vor.u32 %v775, %v779
      %v782 = vshll.u32 %v521, 16
      %v784 = vrot.slane %v782, 1
      %v785 = vsel %vm522, %v780, %v784
      %786 = vrot.lane.b32.xlu0 %v558, 28
      %v787 = vpop.permute.xlu0 %786
      %788 = vrot.lane.b32.xlu0 %v570, 28
      %v789 = vpop.permute.xlu0 %788
      %790 = vrot.lane.b32.xlu0 %v582, 28
      %v791 = vpop.permute.xlu0 %790
      %792 = vrot.lane.b32.xlu0 %v594, 28
      %v793 = vpop.permute.xlu0 %792
      %794 = vrot.lane.b32.xlu0 %v606, 28
      %v795 = vpop.permute.xlu0 %794
      %796 = vrot.lane.b32.xlu0 %v618, 28
      %v797 = vpop.permute.xlu0 %796
      %798 = vrot.lane.b32.xlu0 %v720, 28
      %v799 = vpop.permute.xlu0 %798
      %800 = vrot.lane.b32.xlu0 %v785, 28
      %v801 = vpop.permute.xlu0 %800
      %v803 = vrot.slane %v520, 1
      %v804 = vrot.slane %v521, 1
      %v805 = vsel %vm651, %v803, %v804
      %806 = vrot.lane.b32.xlu0 %v660, 32
      %v807 = vpop.permute.xlu0 %806
      %808 = vrot.lane.b32.xlu0 %v663, 32
      %v809 = vpop.permute.xlu0 %808
      %810 = vrot.lane.b32.xlu0 %v666, 32
      %v811 = vpop.permute.xlu0 %810
      %812 = vrot.lane.b32.xlu0 %v669, 32
      %v813 = vpop.permute.xlu0 %812
      %814 = vrot.lane.b32.xlu0 %v672, 32
      %v815 = vpop.permute.xlu0 %814
      %816 = vrot.lane.b32.xlu0 %v675, 32
      %v817 = vpop.permute.xlu0 %816
      %818 = vrot.lane.b32.xlu0 %v740, 32
      %v819 = vpop.permute.xlu0 %818
      %820 = vrot.lane.b32.xlu0 %v805, 32
      %v821 = vpop.permute.xlu0 %820
      %vm822 = vcmask 31744
      %v824 = vsel %vm822, %v502, %v620
      %v826 = vsel %vm822, %v503, %v622
      %v828 = vsel %vm822, %v504, %v624
      %v830 = vsel %vm822, %v505, %v626
      %v832 = vsel %vm822, %v506, %v628
      %v834 = vsel %vm822, %v507, %v630
      %v836 = vsel %vm822, %v508, %v632
      %v838 = vsel %vm822, %v509, %v634
      %vm839 = vcmask 64512
      %v841 = vsel %vm839, %v824, %v677
      %v843 = vsel %vm839, %v826, %v679
      %v845 = vsel %vm839, %v828, %v681
      %v847 = vsel %vm839, %v830, %v683
      %v849 = vsel %vm839, %v832, %v685
      %v851 = vsel %vm839, %v834, %v687
      %v853 = vsel %vm839, %v836, %v689
      %v855 = vsel %vm839, %v838, %v691
      %vm856 = vcmask 97280
      %v858 = vsel %vm856, %v841, %v694
      %v860 = vsel %vm856, %v843, %v696
      %v862 = vsel %vm856, %v845, %v698
      %v864 = vsel %vm856, %v847, %v700
      %v866 = vsel %vm856, %v849, %v702
      %v868 = vsel %vm856, %v851, %v704
      %v870 = vsel %vm856, %v853, %v706
      %v872 = vsel %vm856, %v855, %v708
      %vm873 = vcmask 130048
      %v875 = vsel %vm873, %v858, %v722
      %v877 = vsel %vm873, %v860, %v724
      %v879 = vsel %vm873, %v862, %v726
      %v881 = vsel %vm873, %v864, %v728
      %v883 = vsel %vm873, %v866, %v730
      %v885 = vsel %vm873, %v868, %v732
      %v887 = vsel %vm873, %v870, %v734
      %v889 = vsel %vm873, %v872, %v736
      %vm890 = vcmask 162816
      %v892 = vsel %vm890, %v875, %v742
      %v894 = vsel %vm890, %v877, %v744
      %v896 = vsel %vm890, %v879, %v746
      %v898 = vsel %vm890, %v881, %v748
      %v900 = vsel %vm890, %v883, %v750
      %v902 = vsel %vm890, %v885, %v752
      %v904 = vsel %vm890, %v887, %v754
      %v906 = vsel %vm890, %v889, %v756
      %vm907 = vcmask 195584
      %v909 = vsel %vm907, %v892, %v759
      %v911 = vsel %vm907, %v894, %v761
      %v913 = vsel %vm907, %v896, %v763
      %v915 = vsel %vm907, %v898, %v765
      %v917 = vsel %vm907, %v900, %v767
      %v919 = vsel %vm907, %v902, %v769
      %v921 = vsel %vm907, %v904, %v771
      %v923 = vsel %vm907, %v906, %v773
      %vm924 = vcmask 228352
      %v926 = vsel %vm924, %v909, %v787
      %v928 = vsel %vm924, %v911, %v789
      %v930 = vsel %vm924, %v913, %v791
      %v932 = vsel %vm924, %v915, %v793
      %v934 = vsel %vm924, %v917, %v795
      %v936 = vsel %vm924, %v919, %v797
      %v938 = vsel %vm924, %v921, %v799
      %v940 = vsel %vm924, %v923, %v801
      %vm941 = vcmask 261120
      %v943 = vsel %vm941, %v926, %v807
      %v945 = vsel %vm941, %v928, %v809
      %v947 = vsel %vm941, %v930, %v811
      %v949 = vsel %vm941, %v932, %v813
      %v951 = vsel %vm941, %v934, %v815
      %v953 = vsel %vm941, %v936, %v817
      %v955 = vsel %vm941, %v938, %v819
      %v957 = vsel %vm941, %v940, %v821
      %v958 = vld [vmem:[%s3] sm:$0xf]
      %v959 = vld [vmem:[%s3 + $0x4] sm:$0xf]
      %v960 = vld [vmem:[%s3 + $0x8] sm:$0xf]
      %v961 = vld [vmem:[%s3 + $0xc] sm:$0xf]
      %v962 = vld [vmem:[%s3 + $0x10] sm:$0x3]
      %v968 = vunpack.c.l.b16 %v958
      %v969 = vunpack.c.l.b16 %v959
      %v970 = vunpack.c.l.b16 %v960
      %v971 = vunpack.c.l.b16 %v961
      %v972 = vunpack.c.l.b16 %v962
      %v973 = vpack.c.b16 %v969, %v968
      %v974 = vpack.c.b16 %v971, %v970
      %v975 = vpack.c.b16 %v972, %v972
      %vm978 = vcmask 293888
      %v979 = vsel %vm978, %v943, 0
      %v981 = vsel %vm978, %v945, 0
      %v983 = vsel %vm978, %v947, 0
      %v985 = vsel %vm978, %v949, 0
      %v987 = vsel %vm978, %v951, 0
      %v989 = vsel %vm978, %v953, 0
      %v991 = vsel %vm978, %v955, 0
      %v993 = vsel %vm978, %v957, 0
      %vm995 = vcmask 1041408
      %v997 = vsel %vm995, %v975, 0
      %999 = vmatprep.subr.bf16.mxu0 0
      %1000 = vmatpush1.bf16.msra.mxu0 0
      %1001 = vmatprep.subr.bf16.mxu0 0
      %1002 = vmatpush1.bf16.msra.mxu0 0
      %1003 = vmatprep.subr.bf16.mxu0 0
      %1004 = vmatpush1.bf16.msra.mxu0 0
      %1005 = vmatprep.subr.bf16.mxu0 0
      %1006 = vmatpush1.bf16.msra.mxu0 0
      %1007 = vmatprep.subr.bf16.mxu0 0
      %1008 = vmatpush1.bf16.msra.mxu0 0
      %1009 = vmatprep.subr.bf16.mxu0 0
      %1010 = vmatpush1.bf16.msra.mxu0 %v997
      %1011 = vmatprep.subr.bf16.mxu0 0
      %1012 = vmatpush1.bf16.msra.mxu0 %v974
      %1013 = vmatprep.subr.bf16.mxu0 0
      %1014 = vmatpush1.bf16.msra.mxu0 %v973
      %1015 = vmatprep.subr.bf16.mxu0 0
      %1016 = vmatpush2.bf16.msra.mxu0 0
      %1017 = vmatprep.subr.bf16.mxu0 0
      %1018 = vmatpush2.bf16.msra.mxu0 0
      %1019 = vmatprep.subr.bf16.mxu0 0
      %1020 = vmatpush2.bf16.msra.mxu0 0
      %1021 = vmatprep.subr.bf16.mxu0 0
      %1022 = vmatpush2.bf16.msra.mxu0 0
      %1023 = vmatprep.subr.bf16.mxu0 0
      %1024 = vmatpush2.bf16.msra.mxu0 0
      %1025 = vmatprep.subr.bf16.mxu0 0
      %1026 = vmatpush2.bf16.msra.mxu0 0
      %1027 = vmatprep.subr.bf16.mxu0 0
      %1028 = vmatpush2.bf16.msra.mxu0 0
      %1029 = vmatprep.subr.bf16.mxu0 0
      %1030 = vmatpush2.bf16.msra.mxu0 0
      %1031 = vmatprep.mubr.bf16.mxu0 0
      %1032 = vmatmul.mubr.bf16.gmra.mxu0 %v979
      %v1033 = vpop.f32.mrf.mxu0
      %v1034 = vadd.f32 0.0, %v1033
      %v1035 = vpop.f32.mrf.mxu0
      %v1036 = vpop.f32.mrf.mxu0
      %v1037 = vadd.f32 0.0, %v1036
      %v1038 = vpop.f32.mrf.mxu0
      %1039 = vmatprep.mubr.bf16.mxu0 0
      %1040 = vmatmul.mubr.bf16.gmra.mxu0 %v981
      %v1041 = vpop.f32.mrf.mxu0
      %v1042 = vadd.f32 0.0, %v1041
      %v1043 = vpop.f32.mrf.mxu0
      %v1044 = vpop.f32.mrf.mxu0
      %v1045 = vadd.f32 0.0, %v1044
      %v1046 = vpop.f32.mrf.mxu0
      %1047 = vmatprep.mubr.bf16.mxu0 0
      %1048 = vmatmul.mubr.bf16.gmra.mxu0 %v983
      %v1049 = vpop.f32.mrf.mxu0
      %v1050 = vadd.f32 0.0, %v1049
      %v1051 = vpop.f32.mrf.mxu0
      %v1052 = vpop.f32.mrf.mxu0
      %v1053 = vadd.f32 0.0, %v1052
      %v1054 = vpop.f32.mrf.mxu0
      %1055 = vmatprep.mubr.bf16.mxu0 0
      %1056 = vmatmul.mubr.bf16.gmra.mxu0 %v985
      %v1057 = vpop.f32.mrf.mxu0
      %v1058 = vadd.f32 0.0, %v1057
      %v1059 = vpop.f32.mrf.mxu0
      %v1060 = vpop.f32.mrf.mxu0
      %v1061 = vadd.f32 0.0, %v1060
      %v1062 = vpop.f32.mrf.mxu0
      %1063 = vmatprep.mubr.bf16.mxu0 0
      %1064 = vmatmul.mubr.bf16.gmra.mxu0 %v987
      %v1065 = vpop.f32.mrf.mxu0
      %v1066 = vadd.f32 0.0, %v1065
      %v1067 = vpop.f32.mrf.mxu0
      %v1068 = vpop.f32.mrf.mxu0
      %v1069 = vadd.f32 0.0, %v1068
      %v1070 = vpop.f32.mrf.mxu0
      %1071 = vmatprep.mubr.bf16.mxu0 0
      %1072 = vmatmul.mubr.bf16.gmra.mxu0 %v989
      %v1073 = vpop.f32.mrf.mxu0
      %v1074 = vadd.f32 0.0, %v1073
      %v1075 = vpop.f32.mrf.mxu0
      %v1076 = vpop.f32.mrf.mxu0
      %v1077 = vadd.f32 0.0, %v1076
      %v1078 = vpop.f32.mrf.mxu0
      %1079 = vmatprep.mubr.bf16.mxu0 0
      %1080 = vmatmul.mubr.bf16.gmra.mxu0 %v991
      %v1081 = vpop.f32.mrf.mxu0
      %v1082 = vadd.f32 0.0, %v1081
      %v1083 = vpop.f32.mrf.mxu0
      %v1084 = vpop.f32.mrf.mxu0
      %v1085 = vadd.f32 0.0, %v1084
      %v1086 = vpop.f32.mrf.mxu0
      %1087 = vmatprep.mubr.bf16.mxu0 0
      %1088 = vmatmul.mubr.bf16.gmra.mxu0 %v993
      %v1089 = vpop.f32.mrf.mxu0
      %v1090 = vadd.f32 0.0, %v1089
      %v1091 = vpop.f32.mrf.mxu0
      %v1092 = vpop.f32.mrf.mxu0
      %v1093 = vadd.f32 0.0, %v1092
      %v1094 = vpop.f32.mrf.mxu0
      %1095 = vdwg.mxu0
      %v1096 = vld [vmem:[%s1] sm:$0x1]
      %v1098 = vlaneseq
      %v1099 = vshrl.u32 %v1098, 7
      %v1100 = vsub.s32 0, %v1099
      %v1101 = vrot.slane %v1096, %v1100
      %v1103 = vmul.f32 %v1034, %v1101
      %v1104 = vmul.f32 %v1037, %v1101
      %v1105 = vmul.f32 %v1042, %v1101
      %v1106 = vmul.f32 %v1045, %v1101
      %v1107 = vmul.f32 %v1050, %v1101
      %v1108 = vmul.f32 %v1053, %v1101
      %v1109 = vmul.f32 %v1058, %v1101
      %v1110 = vmul.f32 %v1061, %v1101
      %v1111 = vmul.f32 %v1066, %v1101
      %v1112 = vmul.f32 %v1069, %v1101
      %v1113 = vmul.f32 %v1074, %v1101
      %v1114 = vmul.f32 %v1077, %v1101
      %v1115 = vmul.f32 %v1082, %v1101
      %v1116 = vmul.f32 %v1085, %v1101
      %v1117 = vmul.f32 %v1090, %v1101
      %v1118 = vmul.f32 %v1093, %v1101
      %v1119 = vld [vmem:[%s2] sm:$0x1]
      %v1121 = vlaneseq
      %v1122 = vshrl.u32 %v1121, 7
      %v1123 = vsub.s32 0, %v1122
      %v1124 = vrot.slane %v1119, %v1123
      %v1126 = vadd.f32 %v1103, %v1124
      %v1127 = vadd.f32 %v1104, %v1124
      %v1128 = vadd.f32 %v1105, %v1124
      %v1129 = vadd.f32 %v1106, %v1124
      %v1130 = vadd.f32 %v1107, %v1124
      %v1131 = vadd.f32 %v1108, %v1124
      %v1132 = vadd.f32 %v1109, %v1124
      %v1133 = vadd.f32 %v1110, %v1124
      %v1134 = vadd.f32 %v1111, %v1124
      %v1135 = vadd.f32 %v1112, %v1124
      %v1136 = vadd.f32 %v1113, %v1124
      %v1137 = vadd.f32 %v1114, %v1124
      %v1138 = vadd.f32 %v1115, %v1124
      %v1139 = vadd.f32 %v1116, %v1124
      %v1140 = vadd.f32 %v1117, %v1124
      %v1141 = vadd.f32 %v1118, %v1124
      %v1142 = vmax.f32 %v1126, 0.0
      %v1143 = vmax.f32 %v1127, 0.0
      %v1144 = vmax.f32 %v1128, 0.0
      %v1145 = vmax.f32 %v1129, 0.0
      %v1146 = vmax.f32 %v1130, 0.0
      %v1147 = vmax.f32 %v1131, 0.0
      %v1148 = vmax.f32 %v1132, 0.0
      %v1149 = vmax.f32 %v1133, 0.0
      %v1150 = vmax.f32 %v1134, 0.0
      %v1151 = vmax.f32 %v1135, 0.0
      %v1152 = vmax.f32 %v1136, 0.0
      %v1153 = vmax.f32 %v1137, 0.0
      %v1154 = vmax.f32 %v1138, 0.0
      %v1155 = vmax.f32 %v1139, 0.0
      %v1156 = vmax.f32 %v1140, 0.0
      %v1157 = vmax.f32 %v1141, 0.0
      %v1158 = vpack.c.bf16 %v1143, %v1142
      %v1159 = vpack.c.bf16 %v1145, %v1144
      %v1160 = vpack.c.bf16 %v1147, %v1146
      %v1161 = vpack.c.bf16 %v1149, %v1148
      %v1162 = vpack.c.bf16 %v1151, %v1150
      %v1163 = vpack.c.bf16 %v1153, %v1152
      %v1164 = vpack.c.bf16 %v1155, %v1154
      %v1165 = vpack.c.bf16 %v1157, %v1156
      %v1166 = vld [vmem:[%s4] sm:$0x3]
      %v1167 = vld [vmem:[%s299] sm:$0xf]
      %v1168 = vld [vmem:[%s299 + $0x4] sm:$0xf]
      %v1169 = vld [vmem:[%s299 + $0x8] sm:$0xf]
      %v1170 = vld [vmem:[%s299 + $0xc] sm:$0xf]
      %v1171 = vld [vmem:[%s299 + $0x10] sm:$0xf]
      %v1172 = vld [vmem:[%s299 + $0x14] sm:$0xf]
      %v1173 = vld [vmem:[%s299 + $0x18] sm:$0xf]
      %v1174 = vld [vmem:[%s299 + $0x1c] sm:$0xf]
      %v1175 = vld [vmem:[%s299 + $0x20] sm:$0xf]
      %v1176 = vld [vmem:[%s299 + $0x24] sm:$0xf]
      %v1177 = vld [vmem:[%s299 + $0x28] sm:$0xf]
      %v1178 = vld [vmem:[%s299 + $0x2c] sm:$0xf]
      %v1179 = vld [vmem:[%s299 + $0x30] sm:$0xf]
      %v1180 = vld [vmem:[%s299 + $0x34] sm:$0xf]
      %v1181 = vld [vmem:[%s299 + $0x38] sm:$0xf]
      %v1182 = vld [vmem:[%s299 + $0x3c] sm:$0xf]
      %v1183 = vunpack.c.l.bf16 %v1167
      %v1184 = vunpack.c.l.bf16 %v1168
      %v1185 = vunpack.c.l.bf16 %v1169
      %v1186 = vunpack.c.l.bf16 %v1170
      %v1187 = vunpack.c.l.bf16 %v1171
      %v1188 = vunpack.c.l.bf16 %v1172
      %v1189 = vunpack.c.l.bf16 %v1173
      %v1190 = vunpack.c.l.bf16 %v1174
      %v1191 = vunpack.c.l.bf16 %v1175
      %v1192 = vunpack.c.l.bf16 %v1176
      %v1193 = vunpack.c.l.bf16 %v1177
      %v1194 = vunpack.c.l.bf16 %v1178
      %v1195 = vunpack.c.l.bf16 %v1179
      %v1196 = vunpack.c.l.bf16 %v1180
      %v1197 = vunpack.c.l.bf16 %v1181
      %v1198 = vunpack.c.l.bf16 %v1182
      %v1200 = vsel %vm822, %v1158, 0
      %v1203 = vsel %vm822, %v1159, 0
      %v1206 = vsel %vm822, %v1160, 0
      %v1209 = vsel %vm822, %v1161, 0
      %v1212 = vsel %vm822, %v1162, 0
      %v1215 = vsel %vm822, %v1163, 0
      %v1218 = vsel %vm822, %v1164, 0
      %v1221 = vsel %vm822, %v1165, 0
      %v1224 = vsel %vm995, %v1166, 0
      %1226 = vmatprep.subr.bf16.mxu0 0
      %1227 = vmatpush1.bf16.msra.mxu0 0
      %1228 = vmatprep.subr.bf16.mxu0 0
      %1229 = vmatpush1.bf16.msra.mxu0 0
      %1230 = vmatprep.subr.bf16.mxu0 0
      %1231 = vmatpush1.bf16.msra.mxu0 0
      %1232 = vmatprep.subr.bf16.mxu0 0
      %1233 = vmatpush1.bf16.msra.mxu0 0
      %1234 = vmatprep.subr.bf16.mxu0 0
      %1235 = vmatpush1.bf16.msra.mxu0 0
      %1236 = vmatprep.subr.bf16.mxu0 0
      %1237 = vmatpush1.bf16.msra.mxu0 0
      %1238 = vmatprep.subr.bf16.mxu0 0
      %1239 = vmatpush1.bf16.msra.mxu0 0
      %1240 = vmatprep.subr.bf16.mxu0 0
      %1241 = vmatpush1.bf16.msra.mxu0 %v1224
      %1242 = vmatprep.subr.bf16.mxu0 0
      %1243 = vmatpush2.bf16.msra.mxu0 0
      %1244 = vmatprep.subr.bf16.mxu0 0
      %1245 = vmatpush2.bf16.msra.mxu0 0
      %1246 = vmatprep.subr.bf16.mxu0 0
      %1247 = vmatpush2.bf16.msra.mxu0 0
      %1248 = vmatprep.subr.bf16.mxu0 0
      %1249 = vmatpush2.bf16.msra.mxu0 0
      %1250 = vmatprep.subr.bf16.mxu0 0
      %1251 = vmatpush2.bf16.msra.mxu0 0
      %1252 = vmatprep.subr.bf16.mxu0 0
      %1253 = vmatpush2.bf16.msra.mxu0 0
      %1254 = vmatprep.subr.bf16.mxu0 0
      %1255 = vmatpush2.bf16.msra.mxu0 0
      %1256 = vmatprep.subr.bf16.mxu0 0
      %1257 = vmatpush2.bf16.msra.mxu0 0
      %1258 = vmatprep.mubr.bf16.mxu0 0
      %1259 = vmatmul.mubr.bf16.gmra.mxu0 %v1200
      %v1260 = vpop.f32.mrf.mxu0
      %v1261 = vadd.f32 %v1183, %v1260
      %v1262 = vpop.f32.mrf.mxu0
      %v1263 = vpop.f32.mrf.mxu0
      %v1264 = vadd.f32 %v1184, %v1263
      %v1265 = vpop.f32.mrf.mxu0
      %1266 = vmatprep.mubr.bf16.mxu0 0
      %1267 = vmatmul.mubr.bf16.gmra.mxu0 %v1203
      %v1268 = vpop.f32.mrf.mxu0
      %v1269 = vadd.f32 %v1185, %v1268
      %v1270 = vpop.f32.mrf.mxu0
      %v1271 = vpop.f32.mrf.mxu0
      %v1272 = vadd.f32 %v1186, %v1271
      %v1273 = vpop.f32.mrf.mxu0
      %1274 = vmatprep.mubr.bf16.mxu0 0
      %1275 = vmatmul.mubr.bf16.gmra.mxu0 %v1206
      %v1276 = vpop.f32.mrf.mxu0
      %v1277 = vadd.f32 %v1187, %v1276
      %v1278 = vpop.f32.mrf.mxu0
      %v1279 = vpop.f32.mrf.mxu0
      %v1280 = vadd.f32 %v1188, %v1279
      %v1281 = vpop.f32.mrf.mxu0
      %1282 = vmatprep.mubr.bf16.mxu0 0
      %1283 = vmatmul.mubr.bf16.gmra.mxu0 %v1209
      %v1284 = vpop.f32.mrf.mxu0
      %v1285 = vadd.f32 %v1189, %v1284
      %v1286 = vpop.f32.mrf.mxu0
      %v1287 = vpop.f32.mrf.mxu0
      %v1288 = vadd.f32 %v1190, %v1287
      %v1289 = vpop.f32.mrf.mxu0
      %1290 = vmatprep.mubr.bf16.mxu0 0
      %1291 = vmatmul.mubr.bf16.gmra.mxu0 %v1212
      %v1292 = vpop.f32.mrf.mxu0
      %v1293 = vadd.f32 %v1191, %v1292
      %v1294 = vpop.f32.mrf.mxu0
      %v1295 = vpop.f32.mrf.mxu0
      %v1296 = vadd.f32 %v1192, %v1295
      %v1297 = vpop.f32.mrf.mxu0
      %1298 = vmatprep.mubr.bf16.mxu0 0
      %1299 = vmatmul.mubr.bf16.gmra.mxu0 %v1215
      %v1300 = vpop.f32.mrf.mxu0
      %v1301 = vadd.f32 %v1193, %v1300
      %v1302 = vpop.f32.mrf.mxu0
      %v1303 = vpop.f32.mrf.mxu0
      %v1304 = vadd.f32 %v1194, %v1303
      %v1305 = vpop.f32.mrf.mxu0
      %1306 = vmatprep.mubr.bf16.mxu0 0
      %1307 = vmatmul.mubr.bf16.gmra.mxu0 %v1218
      %v1308 = vpop.f32.mrf.mxu0
      %v1309 = vadd.f32 %v1195, %v1308
      %v1310 = vpop.f32.mrf.mxu0
      %v1311 = vpop.f32.mrf.mxu0
      %v1312 = vadd.f32 %v1196, %v1311
      %v1313 = vpop.f32.mrf.mxu0
      %1314 = vmatprep.mubr.bf16.mxu0 0
      %1315 = vmatmul.mubr.bf16.gmra.mxu0 %v1221
      %v1316 = vpop.f32.mrf.mxu0
      %v1317 = vadd.f32 %v1197, %v1316
      %v1318 = vpop.f32.mrf.mxu0
      %v1319 = vpop.f32.mrf.mxu0
      %v1320 = vadd.f32 %v1198, %v1319
      %v1321 = vpop.f32.mrf.mxu0
      %1322 = vdwg.mxu0
      %1323 = vst.msk [vmem:[%s309] sm:$0xff] %vm873, %v1261
      %1324 = vst.msk [vmem:[%s309 + $0x8] sm:$0xff] %vm873, %v1264
      %1325 = vst.msk [vmem:[%s309 + $0x10] sm:$0xff] %vm873, %v1269
      %1326 = vst.msk [vmem:[%s309 + $0x18] sm:$0xff] %vm873, %v1272
      %1327 = vst.msk [vmem:[%s309 + $0x20] sm:$0xff] %vm873, %v1277
      %1328 = vst.msk [vmem:[%s309 + $0x28] sm:$0xff] %vm873, %v1280
      %1329 = vst.msk [vmem:[%s309 + $0x30] sm:$0xff] %vm873, %v1285
      %1330 = vst.msk [vmem:[%s309 + $0x38] sm:$0xff] %vm873, %v1288
      %1331 = vst.msk [vmem:[%s309 + $0x40] sm:$0xff] %vm873, %v1293
      %1332 = vst.msk [vmem:[%s309 + $0x48] sm:$0xff] %vm873, %v1296
      %1333 = vst.msk [vmem:[%s309 + $0x50] sm:$0xff] %vm873, %v1301
      %1334 = vst.msk [vmem:[%s309 + $0x58] sm:$0xff] %vm873, %v1304
      %1335 = vst.msk [vmem:[%s309 + $0x60] sm:$0xff] %vm873, %v1309
      %1336 = vst.msk [vmem:[%s309 + $0x68] sm:$0xff] %vm873, %v1312
      %1337 = vst.msk [vmem:[%s309 + $0x70] sm:$0xff] %vm873, %v1317
      %1338 = vst.msk [vmem:[%s309 + $0x78] sm:$0xff] %vm873, %v1320
      %s1339 = smul.u32 16, %s22
      %p1340 = scmp.lt.s32.totalorder %s21, 1
      %s1341 = scalar_select %p1340, %s21, 1
      %p1342 = scmp.lt.s32.totalorder %s1339, 31
      %s1343 = scalar_select %p1342, %s1339, 31
      %s1344 = smul.addr %s1341, 32
      %s1345 = sadd.s32 %s1343, %s1344
      %s1346 = smul.addr %s1345, 8
      %s1347 = scalar_lea.vmem %s6, %s1346
      // Predicated region
      $region49: #{preact_bottleneck_forward.3} parent=43 // pred_check
        %p1348 = pneg %p187
      $region50: #{preact_bottleneck_forward.3} parent=43 // pred_check_branch
        %1350 = sbr.rel (%p1348) target = $region52
      $region51: #{preact_bottleneck_forward.3} parent=43 // pred_region
        %s1351 = smul.u32 16, %s22
      $region52: #{preact_bottleneck_forward.3} parent=43 // pred_fallthru
        _
    $region44: #{preact_bottleneck_forward.3} parent=5 // pred_fallthru
      _
    %p1352 = scmp.le.s32.totalorder 2, %s12
    // Predicated region
    $region53: #{preact_bottleneck_forward.3} parent=5 // pred_check
      %p1353 = pneg %p1352
    $region54: #{preact_bottleneck_forward.3} parent=5 // pred_check_branch
      %1355 = sbr.rel (%p1353) target = $region56
    $region55: #{preact_bottleneck_forward.3} parent=5 // pred_region
      %s1356 = ssub.s32 %s12, 2
      // Predicated region
      $region57: #{preact_bottleneck_forward.3} parent=55 // pred_check
        %p1357 = pneg %p193
      $region58: #{preact_bottleneck_forward.3} parent=55 // pred_check_branch
        %1359 = sbr.rel (%p1357) target = $region60
      $region59: #{preact_bottleneck_forward.3} parent=55 // pred_region
        %s1360 = smul.u32 16, %s24
        %p1361 = scmp.lt.s32.totalorder %s23, 1
        %s1362 = scalar_select %p1361, %s23, 1
        %p1363 = scmp.lt.s32.totalorder %s1360, 31
        %s1364 = scalar_select %p1363, %s1360, 31
        %s1365 = smul.addr %s1362, 32
        %s1366 = sadd.s32 %s1364, %s1365
        %s1367 = smul.addr %s1366, 8
        %s1368 = scalar_lea.vmem %s6, %s1367
      $region60: #{preact_bottleneck_forward.3} parent=55 // pred_fallthru
        _
    $region56: #{preact_bottleneck_forward.3} parent=5 // pred_fallthru
      _
  $region6: #{preact_bottleneck_forward.3} parent=0 // loop_footer
    %s16 = sadd.s32 1, %s12
  $region7: #{preact_bottleneck_forward.3} parent=0 // loop_footer_branch
    %11 = sbr.rel target = $region3
  $region8: #{preact_bottleneck_forward.3} parent=0 // loop_exit
    _

</llo_original>
